<compile_context>
chip_gen: v7x
topology: tpu7x:2x2x1
jax: 0.10.0
libtpu: 0.0.40
codegen_flags: <defaults>
</compile_context>

<pallas_src>
import functools

import jax
import jax.numpy as jnp
from jax.experimental import pallas as pl
from jax.experimental.pallas import tpu as pltpu

EPS = 1e-6


def _round_up(v, m):
    return ((v + m - 1) // m) * m


def _round_down(v, m):
    return (v // m) * m


def _vmem_capacity_bytes():
    try:
        return int(pltpu.get_tpu_info().vmem_capacity_bytes)
    except Exception:
        return 64 << 20  # conservative (v7x-sized) fallback


def _choose_tiles(B, C, HW, in_itemsize, vmem_cap):
    """Pick (b_tile, hw_tile) so 2 double-buffered x tiles + f32 accumulator fit."""
    b_tile = min(_round_up(B, 8), 64)
    hw_cap = _round_up(HW, 128)
    budget = int(vmem_cap * 0.45)
    per_lane = (2 * in_itemsize + 4) * C  # 2 input buffers + f32 accumulator

    def max_hw(bt):
        return _round_down(max(budget // (per_lane * bt), 0), 128)

    hw_tile = min(hw_cap, 4096, max_hw(b_tile))
    # Prefer wide (>=512 lane) HW tiles; shrink the batch tile first if C is huge.
    while hw_tile < min(512, hw_cap) and b_tile > 8:
        b_tile = max(8, b_tile // 2)
        hw_tile = min(hw_cap, 4096, max_hw(b_tile))
    return b_tile, max(hw_tile, 128)


def _classifier_kernel(x_ref, gamma_ref, beta_ref, w_ref, b_ref, out_ref, acc_ref,
                       *, inv_hw):
    hw_idx = pl.program_id(1)

    @pl.when(hw_idx == 0)
    def _init():
        acc_ref[...] = jnp.zeros_like(acc_ref)

    # Partial spatial sums: pure VPU adds every grid step (no per-tile cross-lane
    # reduce, no per-tile divide). Accumulate in f32 even for bf16 inputs.
    acc_ref[...] += x_ref[...].astype(jnp.float32)

    @pl.when(hw_idx == pl.num_programs(1) - 1)
    def _finalize():
        # One XLU lane-reduction + one scale by 1/(H*W) (true spatial size:
        # zero-padded lanes contribute nothing to the sum).
        pooled = jnp.sum(acc_ref[...], axis=-1) * inv_hw            # (b_tile, C)

        # LayerNorm over channels, eps=1e-6, biased variance (torch semantics).
        mu = jnp.mean(pooled, axis=-1, keepdims=True)
        var = jnp.mean((pooled - mu) ** 2, axis=-1, keepdims=True)
        normed = (pooled - mu) * jax.lax.rsqrt(var + EPS)
        normed = normed * gamma_ref[...] + beta_ref[...]

        # Tiny head matmul: once per batch tile, only in the finalize branch.
        out_ref[...] = (
            jnp.dot(normed, w_ref[...], preferred_element_type=jnp.float32)
            + b_ref[...]
        )


def classifier_forward(x_nchw, gamma, beta, w, b, *, b_tile=None, hw_tile=None):
    """x_nchw: (B, C, H, W). Returns (B, num_classes) float32."""
    B, C, H, W = x_nchw.shape
    N = w.shape[1]
    HW = H * W
    itemsize = jnp.dtype(x_nchw.dtype).itemsize
    vmem_cap = _vmem_capacity_bytes()

    auto_b, auto_hw = _choose_tiles(B, C, HW, itemsize, vmem_cap)
    b_tile = auto_b if b_tile is None else _round_up(int(b_tile), 8)
    hw_tile = auto_hw if hw_tile is None else _round_up(int(hw_tile), 128)
    hw_tile = min(hw_tile, _round_up(HW, 128))

    B_pad = _round_up(B, b_tile)
    HW_pad = _round_up(HW, hw_tile)
    N_pad = _round_up(N, 128)            # lane-dense output stores

    # Glue reshape / zero-padding in plain JAX (zeros are sum-neutral).
    x_flat = x_nchw.reshape(B, C, HW)
    x_p = jnp.pad(x_flat, ((0, B_pad - B), (0, 0), (0, HW_pad - HW)))
    gamma2 = gamma.reshape(1, C).astype(jnp.float32)
    beta2 = beta.reshape(1, C).astype(jnp.float32)
    w_p = jnp.pad(w.astype(jnp.float32), ((0, 0), (0, N_pad - N)))
    b_p = jnp.pad(b.reshape(1, N).astype(jnp.float32), ((0, 0), (0, N_pad - N)))

    grid = (B_pad // b_tile, HW_pad // hw_tile)

    # VMEM budget: double-buffered x tile + f32 accumulator + small resident params.
    x_tile_bytes = b_tile * C * hw_tile * itemsize
    acc_bytes = b_tile * C * hw_tile * 4
    small_bytes = 2 * ((2 * C + C * N_pad + N_pad + b_tile * N_pad) * 4)
    needed = 2 * x_tile_bytes + acc_bytes + small_bytes + (2 << 20)
    vmem_limit = int(min(vmem_cap * 3 // 4, max(needed, 32 << 20)))

    kernel = functools.partial(_classifier_kernel, inv_hw=1.0 / float(HW))

    out = pl.pallas_call(
        kernel,
        out_shape=jax.ShapeDtypeStruct((B_pad, N_pad), jnp.float32),
        grid_spec=pltpu.PrefetchScalarGridSpec(
            num_scalar_prefetch=0,
            grid=grid,
            in_specs=[
                pl.BlockSpec((b_tile, C, hw_tile), lambda bi, hi: (bi, 0, hi)),
                pl.BlockSpec((1, C), lambda bi, hi: (0, 0)),        # resident
                pl.BlockSpec((1, C), lambda bi, hi: (0, 0)),        # resident
                pl.BlockSpec((C, N_pad), lambda bi, hi: (0, 0)),    # resident
                pl.BlockSpec((1, N_pad), lambda bi, hi: (0, 0)),    # resident
            ],
            out_specs=pl.BlockSpec((b_tile, N_pad), lambda bi, hi: (bi, 0)),
            scratch_shapes=[pltpu.VMEM((b_tile, C, hw_tile), jnp.float32)],
        ),
        compiler_params=pltpu.CompilerParams(
            dimension_semantics=("parallel", "arbitrary"),
            vmem_limit_bytes=vmem_limit,
        ),
    )(x_p, gamma2, beta2, w_p, b_p)

    return out[:B, :N]


def reference_forward(x_nchw, gamma, beta, w, b):
    pooled = jnp.mean(x_nchw.astype(jnp.float32), axis=(2, 3))
    mu = jnp.mean(pooled, axis=-1, keepdims=True)
    var = jnp.mean((pooled - mu) ** 2, axis=-1, keepdims=True)
    normed = (pooled - mu) / jnp.sqrt(var + EPS)
    normed = normed * gamma[None, :] + beta[None, :]
    return normed @ w + b[None, :]


if __name__ == "__main__":
    B, C, H, W = 2, 32, 16, 16
    num_classes = 8

    key = jax.random.PRNGKey(0)
    kx, kg, kb, kw, kbias = jax.random.split(key, 5)

    x = jax.random.normal(kx, (B, C, H, W), dtype=jnp.float32)
    gamma = 1.0 + 0.01 * jax.random.normal(kg, (C,), dtype=jnp.float32)
    beta = 0.01 * jax.random.normal(kb, (C,), dtype=jnp.float32)
    w = 0.02 * jax.random.normal(kw, (C, num_classes), dtype=jnp.float32)
    b = 0.01 * jax.random.normal(kbias, (num_classes,), dtype=jnp.float32)

    ref = reference_forward(x, gamma, beta, w, b)

    # 1) Auto-selected tiles (single HW step at this tiny shape).
    out_auto = jax.block_until_ready(classifier_forward(x, gamma, beta, w, b))
    # 2) Forced small HW tile to exercise the multi-step accumulate/finalize path.
    out_tiled = jax.block_until_ready(
        classifier_forward(x, gamma, beta, w, b, b_tile=8, hw_tile=128))

    assert out_auto.shape == (B, num_classes)
    assert out_tiled.shape == (B, num_classes)
    assert jnp.allclose(out_auto, ref, atol=1e-4, rtol=1e-4)
    assert jnp.allclose(out_tiled, ref, atol=1e-4, rtol=1e-4)

    print("KERNEL_OK")
</pallas_src>

<mosaic_0001>
module attributes {stable_mosaic.version = 11 : i64} {
  func.func @_classifier_kernel(%arg0: i32, %arg1: i32, %arg2: memref<8x32x256xf32, #tpu.memory_space<vmem>>, %arg3: memref<1x32xf32, #tpu.memory_space<vmem>>, %arg4: memref<1x32xf32, #tpu.memory_space<vmem>>, %arg5: memref<32x128xf32, #tpu.memory_space<vmem>>, %arg6: memref<1x128xf32, #tpu.memory_space<vmem>>, %arg7: memref<8x128xf32, #tpu.memory_space<vmem>>, %arg8: memref<8x32x256xf32, #tpu.memory_space<vmem>>) attributes {dimension_semantics = [#tpu.dimension_semantics<parallel>, #tpu.dimension_semantics<arbitrary>], iteration_bounds = array<i64: 1, 1>, scalar_prefetch = 0 : i64, scratch_operands = 1 : i64, tpu.core_type = #tpu.core_type<tc>, window_params = [{transform_indices = @transform_0, window_bounds = array<i64: 8, 32, 256>}, {pipeline_mode = #tpu.pipeline_mode<synchronous>, transform_indices = @transform_1, window_bounds = array<i64: 1, 32>}, {pipeline_mode = #tpu.pipeline_mode<synchronous>, transform_indices = @transform_2, window_bounds = array<i64: 1, 32>}, {pipeline_mode = #tpu.pipeline_mode<synchronous>, transform_indices = @transform_3, window_bounds = array<i64: 32, 128>}, {pipeline_mode = #tpu.pipeline_mode<synchronous>, transform_indices = @transform_4, window_bounds = array<i64: 1, 128>}, {transform_indices = @transform_5, window_bounds = array<i64: 8, 128>}]} {
    %c0_i32 = arith.constant 0 : i32
    %0 = arith.cmpi eq, %arg1, %c0_i32 : i32
    %1 = arith.extui %0 : i1 to i32
    %c0_i32_0 = arith.constant 0 : i32
    %2 = arith.cmpi ne, %1, %c0_i32_0 : i32
    scf.if %2 {
      %cst = arith.constant 0.000000e+00 : f32
      %10 = vector.broadcast %cst : f32 to vector<8x32x256xf32>
      %c0_11 = arith.constant 0 : index
      %c0_12 = arith.constant 0 : index
      %c0_13 = arith.constant 0 : index
      %11 = vector.load %arg8[%c0_11, %c0_12, %c0_13] : memref<8x32x256xf32, #tpu.memory_space<vmem>>, vector<8x32x256xf32>
      tpu.vector_store %arg8[%c0_11, %c0_12, %c0_13], %10 {strides = array<i32>} : memref<8x32x256xf32, #tpu.memory_space<vmem>>, vector<8x32x256xf32>,
    } else {
    }
    %c0 = arith.constant 0 : index
    %c0_1 = arith.constant 0 : index
    %c0_2 = arith.constant 0 : index
    %3 = vector.load %arg8[%c0, %c0_1, %c0_2] : memref<8x32x256xf32, #tpu.memory_space<vmem>>, vector<8x32x256xf32>
    %c0_3 = arith.constant 0 : index
    %c0_4 = arith.constant 0 : index
    %c0_5 = arith.constant 0 : index
    %4 = vector.load %arg2[%c0_3, %c0_4, %c0_5] : memref<8x32x256xf32, #tpu.memory_space<vmem>>, vector<8x32x256xf32>
    %5 = arith.addf %3, %4 : vector<8x32x256xf32>
    %c0_6 = arith.constant 0 : index
    %c0_7 = arith.constant 0 : index
    %c0_8 = arith.constant 0 : index
    %6 = vector.load %arg8[%c0_6, %c0_7, %c0_8] : memref<8x32x256xf32, #tpu.memory_space<vmem>>, vector<8x32x256xf32>
    tpu.vector_store %arg8[%c0_6, %c0_7, %c0_8], %5 {strides = array<i32>} : memref<8x32x256xf32, #tpu.memory_space<vmem>>, vector<8x32x256xf32>,
    %c0_i32_9 = arith.constant 0 : i32
    %7 = arith.cmpi eq, %arg1, %c0_i32_9 : i32
    %8 = arith.extui %7 : i1 to i32
    %c0_i32_10 = arith.constant 0 : i32
    %9 = arith.cmpi ne, %8, %c0_i32_10 : i32
    scf.if %9 {
      %c0_11 = arith.constant 0 : index
      %c0_12 = arith.constant 0 : index
      %c0_13 = arith.constant 0 : index
      %10 = vector.load %arg8[%c0_11, %c0_12, %c0_13] : memref<8x32x256xf32, #tpu.memory_space<vmem>>, vector<8x32x256xf32>
      %cst = arith.constant dense<0.000000e+00> : vector<8x32xf32>
      %11 = vector.multi_reduction <add>, %10, %cst [2] : vector<8x32x256xf32> to vector<8x32xf32>
      %cst_14 = arith.constant 3.906250e-03 : f32
      %12 = vector.broadcast %cst_14 : f32 to vector<8x32xf32>
      %13 = arith.mulf %11, %12 : vector<8x32xf32>
      %cst_15 = arith.constant dense<0.000000e+00> : vector<8xf32>
      %14 = vector.multi_reduction <add>, %13, %cst_15 [1] : vector<8x32xf32> to vector<8xf32>
      %15 = vector.shape_cast %14 : vector<8xf32> to vector<8x1xf32>
      %cst_16 = arith.constant 3.200000e+01 : f32
      %16 = vector.broadcast %cst_16 : f32 to vector<8x1xf32>
      %17 = arith.divf %15, %16 : vector<8x1xf32>
      %18 = vector.broadcast %17 : vector<8x1xf32> to vector<8x32xf32>
      %19 = arith.subf %13, %18 : vector<8x32xf32>
      %20 = arith.mulf %19, %19 : vector<8x32xf32>
      %cst_17 = arith.constant dense<0.000000e+00> : vector<8xf32>
      %21 = vector.multi_reduction <add>, %20, %cst_17 [1] : vector<8x32xf32> to vector<8xf32>
      %22 = vector.shape_cast %21 : vector<8xf32> to vector<8x1xf32>
      %cst_18 = arith.constant 3.200000e+01 : f32
      %23 = vector.broadcast %cst_18 : f32 to vector<8x1xf32>
      %24 = arith.divf %22, %23 : vector<8x1xf32>
      %25 = vector.broadcast %17 : vector<8x1xf32> to vector<8x32xf32>
      %26 = arith.subf %13, %25 : vector<8x32xf32>
      %cst_19 = arith.constant 9.99999997E-7 : f32
      %27 = vector.broadcast %cst_19 : f32 to vector<8x1xf32>
      %28 = arith.addf %24, %27 : vector<8x1xf32>
      %29 = math.rsqrt %28 : vector<8x1xf32>
      %30 = vector.broadcast %29 : vector<8x1xf32> to vector<8x32xf32>
      %31 = arith.mulf %26, %30 : vector<8x32xf32>
      %c0_20 = arith.constant 0 : index
      %c0_21 = arith.constant 0 : index
      %32 = vector.load %arg3[%c0_20, %c0_21] : memref<1x32xf32, #tpu.memory_space<vmem>>, vector<1x32xf32>
      %33 = vector.broadcast %32 : vector<1x32xf32> to vector<8x32xf32>
      %34 = arith.mulf %31, %33 : vector<8x32xf32>
      %c0_22 = arith.constant 0 : index
      %c0_23 = arith.constant 0 : index
      %35 = vector.load %arg4[%c0_22, %c0_23] : memref<1x32xf32, #tpu.memory_space<vmem>>, vector<1x32xf32>
      %36 = vector.broadcast %35 : vector<1x32xf32> to vector<8x32xf32>
      %37 = arith.addf %34, %36 : vector<8x32xf32>
      %c0_24 = arith.constant 0 : index
      %c0_25 = arith.constant 0 : index
      %38 = vector.load %arg5[%c0_24, %c0_25] : memref<32x128xf32, #tpu.memory_space<vmem>>, vector<32x128xf32>
      %cst_26 = arith.constant dense<0.000000e+00> : vector<8x128xf32>
      %39 = tpu.matmul %37, %38, %cst_26 {dimension_numbers = #tpu.dot_dimension_numbers<[1], [0], [0], [1], [0, 0, 1, 1], [], []>} : vector<8x32xf32>, vector<32x128xf32>, vector<8x128xf32> -> vector<8x128xf32>
      %c0_27 = arith.constant 0 : index
      %c0_28 = arith.constant 0 : index
      %40 = vector.load %arg6[%c0_27, %c0_28] : memref<1x128xf32, #tpu.memory_space<vmem>>, vector<1x128xf32>
      %41 = vector.broadcast %40 : vector<1x128xf32> to vector<8x128xf32>
      %42 = arith.addf %39, %41 : vector<8x128xf32>
      %c0_29 = arith.constant 0 : index
      %c0_30 = arith.constant 0 : index
      %43 = vector.load %arg7[%c0_29, %c0_30] : memref<8x128xf32, #tpu.memory_space<vmem>>, vector<8x128xf32>
      tpu.vector_store %arg7[%c0_29, %c0_30], %42 {strides = array<i32>} : memref<8x128xf32, #tpu.memory_space<vmem>>, vector<8x128xf32>,
    } else {
    }
    return
  }
  func.func @transform_0(%arg0: i32, %arg1: i32) -> (i32, i32, i32) {
    %c0_i32 = arith.constant 0 : i32
    %c0_i32_0 = arith.constant 0 : i32
    return %arg0, %c0_i32, %arg1 : i32, i32, i32
  }
  func.func @transform_1(%arg0: i32, %arg1: i32) -> (i32, i32) {
    %c0_i32 = arith.constant 0 : i32
    %c0_i32_0 = arith.constant 0 : i32
    %c0_i32_1 = arith.constant 0 : i32
    return %c0_i32, %c0_i32_0 : i32, i32
  }
  func.func @transform_2(%arg0: i32, %arg1: i32) -> (i32, i32) {
    %c0_i32 = arith.constant 0 : i32
    %c0_i32_0 = arith.constant 0 : i32
    %c0_i32_1 = arith.constant 0 : i32
    return %c0_i32, %c0_i32_0 : i32, i32
  }
  func.func @transform_3(%arg0: i32, %arg1: i32) -> (i32, i32) {
    %c0_i32 = arith.constant 0 : i32
    %c0_i32_0 = arith.constant 0 : i32
    %c0_i32_1 = arith.constant 0 : i32
    return %c0_i32, %c0_i32_0 : i32, i32
  }
  func.func @transform_4(%arg0: i32, %arg1: i32) -> (i32, i32) {
    %c0_i32 = arith.constant 0 : i32
    %c0_i32_0 = arith.constant 0 : i32
    %c0_i32_1 = arith.constant 0 : i32
    return %c0_i32, %c0_i32_0 : i32, i32
  }
  func.func @transform_5(%arg0: i32, %arg1: i32) -> (i32, i32) {
    %c0_i32 = arith.constant 0 : i32
    %c0_i32_0 = arith.constant 0 : i32
    return %arg0, %c0_i32 : i32, i32
  }
}

</mosaic_0001>

<llo_original>
// kernel: tpu_custom_call.1
$region0: #{tpu_custom_call.1}
  #allocation0 [shape = 'u32[]', space=smem, size = 0x4, offset = 0x4, fixed_abs, tag = 'smem constant byte address 0x4 - core index']
  #allocation1 [shape = 'u32[144,128]{1,0:T(1,128)}', space=vmem, size = 0x12000, scoped, tag = 'internal scratch']
  #allocation2 [shape = 'f32[8,32,256]{2,1,0:T(8,128)}', space=vmem, size = 0x40000, scoped, tag = 'scratch operand']
  %s0 = inlined_call_operand.hbm [shape: f32[8,32,256], index: 0, kind: input, shape index: {}]
  %s1 = inlined_call_operand.vmem [shape: f32[1,32], index: 1, kind: input, shape index: {}]
  %s2 = inlined_call_operand.vmem [shape: f32[1,32], index: 2, kind: input, shape index: {}]
  %s3 = inlined_call_operand.hbm [shape: f32[32,128], index: 3, kind: input, shape index: {}]
  %s4 = inlined_call_operand.vmem [shape: f32[1,128], index: 4, kind: input, shape index: {}]
  %s5 = inlined_call_operand.hbm [shape: f32[8,128], index: 5, kind: output, shape index: {}]
  %s6 = sld [smem:[#allocation0]]
  $region46: #{tpu_custom_call.1} parent=0
    _
  %s8 = ssub.s32 1, %s6
  %s9 = scalar_select 0, %s8, %s6
  $region1: #{tpu_custom_call.1} parent=0
    #allocation3 [shape = 'u8[262144]{0}', space=vmem, size = 0x40000, scoped, tag = 'input window, operand 0, single buffered']
    #allocation4 [shape = 's32[1]{0}', space=sflag, size = 0x4, scoped, tag = 'scoped memory for tpu_custom_call.1']
    #allocation5 [shape = 's32[1]{0}', space=sflag, size = 0x4, scoped, tag = 'scoped memory for tpu_custom_call.1']
    #allocation6 [shape = 'u8[16384]{0}', space=vmem, size = 0x4000, scoped, tag = 'input window, operand 3, single buffered']
    #allocation7 [shape = 's32[1]{0}', space=sflag, size = 0x4, scoped, tag = 'scoped memory for tpu_custom_call.1']
    #allocation8 [shape = 'u8[4096]{0}', space=vmem, size = 0x1000, scoped, tag = 'output window, operand 0, single buffered']
    %10 = vsyncpa [#allocation4], 0
    %11 = vsyncpa [#allocation7], 0
    %12 = vsyncpa [#allocation5], 0
    // Predicated region
    $region2: #{tpu_custom_call.1} parent=1 // pred_check
      _
    $region3: #{tpu_custom_call.1} parent=1 // pred_check_branch
      %14 = sbr.rel (0) target = $region5
    $region4: #{tpu_custom_call.1} parent=1 // pred_region
      %s16 = ssub.s32 8192, 8192
      %17 = vsyncadd [#allocation4], %s16
      %s18 = sshll.u32 [#allocation3], 4
      %s19 = int_to_ptr.vmem [resolvable:$true] %s18
      %24 = dma.hbm_to_vmem [thread:$0]  %s0, 8192, %s19, [#allocation4], 256, 256, 16
    $region5: #{tpu_custom_call.1} parent=1 // pred_fallthru
      _
    // Predicated region
    $region6: #{tpu_custom_call.1} parent=1 // pred_check
      _
    $region7: #{tpu_custom_call.1} parent=1 // pred_check_branch
      %26 = sbr.rel (0) target = $region9
    $region8: #{tpu_custom_call.1} parent=1 // pred_region
      _
    $region9: #{tpu_custom_call.1} parent=1 // pred_fallthru
      _
    // Predicated region
    $region10: #{tpu_custom_call.1} parent=1 // pred_check
      _
    $region11: #{tpu_custom_call.1} parent=1 // pred_check_branch
      %28 = sbr.rel (0) target = $region13
    $region12: #{tpu_custom_call.1} parent=1 // pred_region
      _
    $region13: #{tpu_custom_call.1} parent=1 // pred_fallthru
      _
    // Predicated region
    $region14: #{tpu_custom_call.1} parent=1 // pred_check
      _
    $region15: #{tpu_custom_call.1} parent=1 // pred_check_branch
      %30 = sbr.rel (0) target = $region17
    $region16: #{tpu_custom_call.1} parent=1 // pred_region
      %s32 = ssub.s32 512, 512
      %33 = vsyncadd [#allocation7], %s32
      %s34 = sshll.u32 [#allocation6], 4
      %s35 = int_to_ptr.vmem [resolvable:$true] %s34
      %40 = dma.hbm_to_vmem [thread:$0]  %s3, 512, %s35, [#allocation7], 128, 128, 8
    $region17: #{tpu_custom_call.1} parent=1 // pred_fallthru
      _
    // Predicated region
    $region18: #{tpu_custom_call.1} parent=1 // pred_check
      _
    $region19: #{tpu_custom_call.1} parent=1 // pred_check_branch
      %42 = sbr.rel (0) target = $region21
    $region20: #{tpu_custom_call.1} parent=1 // pred_region
      _
    $region21: #{tpu_custom_call.1} parent=1 // pred_fallthru
      _
    // Predicated region
    $region22: #{tpu_custom_call.1} parent=1 // pred_check
      _
    $region23: #{tpu_custom_call.1} parent=1 // pred_check_branch
      %44 = sbr.rel (0) target = $region25
    $region24: #{tpu_custom_call.1} parent=1 // pred_region
      %45 = dma.done [#allocation4], 8192
    $region25: #{tpu_custom_call.1} parent=1 // pred_fallthru
      _
    // Predicated region
    $region26: #{tpu_custom_call.1} parent=1 // pred_check
      _
    $region27: #{tpu_custom_call.1} parent=1 // pred_check_branch
      %47 = sbr.rel (0) target = $region29
    $region28: #{tpu_custom_call.1} parent=1 // pred_region
      %48 = dma.done [#allocation7], 512
    $region29: #{tpu_custom_call.1} parent=1 // pred_fallthru
      _
    %p49 = scmp.eq.s32.totalorder 0, 0
    // Predicated region
    $region30: #{tpu_custom_call.1} parent=1 // pred_check
      %p50 = pneg %p49
    $region31: #{tpu_custom_call.1} parent=1 // pred_check_branch
      %52 = sbr.rel (%p50) target = $region33
    $region32: #{tpu_custom_call.1} parent=1 // pred_region
      %53 = vst [vmem:[#allocation2] sm:$0xff] 0.0
      %54 = vst [vmem:[#allocation2 + $0x8] sm:$0xff] 0.0
      %55 = vst [vmem:[#allocation2 + $0x10] sm:$0xff] 0.0
      %56 = vst [vmem:[#allocation2 + $0x18] sm:$0xff] 0.0
      %57 = vst [vmem:[#allocation2 + $0x20] sm:$0xff] 0.0
      %58 = vst [vmem:[#allocation2 + $0x28] sm:$0xff] 0.0
      %59 = vst [vmem:[#allocation2 + $0x30] sm:$0xff] 0.0
      %60 = vst [vmem:[#allocation2 + $0x38] sm:$0xff] 0.0
      %61 = vst [vmem:[#allocation2 + $0x40] sm:$0xff] 0.0
      %62 = vst [vmem:[#allocation2 + $0x48] sm:$0xff] 0.0
      %63 = vst [vmem:[#allocation2 + $0x50] sm:$0xff] 0.0
      %64 = vst [vmem:[#allocation2 + $0x58] sm:$0xff] 0.0
      %65 = vst [vmem:[#allocation2 + $0x60] sm:$0xff] 0.0
      %66 = vst [vmem:[#allocation2 + $0x68] sm:$0xff] 0.0
      %67 = vst [vmem:[#allocation2 + $0x70] sm:$0xff] 0.0
      %68 = vst [vmem:[#allocation2 + $0x78] sm:$0xff] 0.0
      %69 = vst [vmem:[#allocation2 + $0x80] sm:$0xff] 0.0
      %70 = vst [vmem:[#allocation2 + $0x88] sm:$0xff] 0.0
      %71 = vst [vmem:[#allocation2 + $0x90] sm:$0xff] 0.0
      %72 = vst [vmem:[#allocation2 + $0x98] sm:$0xff] 0.0
      %73 = vst [vmem:[#allocation2 + $0xa0] sm:$0xff] 0.0
      %74 = vst [vmem:[#allocation2 + $0xa8] sm:$0xff] 0.0
      %75 = vst [vmem:[#allocation2 + $0xb0] sm:$0xff] 0.0
      %76 = vst [vmem:[#allocation2 + $0xb8] sm:$0xff] 0.0
      %77 = vst [vmem:[#allocation2 + $0xc0] sm:$0xff] 0.0
      %78 = vst [vmem:[#allocation2 + $0xc8] sm:$0xff] 0.0
      %79 = vst [vmem:[#allocation2 + $0xd0] sm:$0xff] 0.0
      %80 = vst [vmem:[#allocation2 + $0xd8] sm:$0xff] 0.0
      %81 = vst [vmem:[#allocation2 + $0xe0] sm:$0xff] 0.0
      %82 = vst [vmem:[#allocation2 + $0xe8] sm:$0xff] 0.0
      %83 = vst [vmem:[#allocation2 + $0xf0] sm:$0xff] 0.0
      %84 = vst [vmem:[#allocation2 + $0xf8] sm:$0xff] 0.0
      %85 = vst [vmem:[#allocation2 + $0x100] sm:$0xff] 0.0
      %86 = vst [vmem:[#allocation2 + $0x108] sm:$0xff] 0.0
      %87 = vst [vmem:[#allocation2 + $0x110] sm:$0xff] 0.0
      %88 = vst [vmem:[#allocation2 + $0x118] sm:$0xff] 0.0
      %89 = vst [vmem:[#allocation2 + $0x120] sm:$0xff] 0.0
      %90 = vst [vmem:[#allocation2 + $0x128] sm:$0xff] 0.0
      %91 = vst [vmem:[#allocation2 + $0x130] sm:$0xff] 0.0
      %92 = vst [vmem:[#allocation2 + $0x138] sm:$0xff] 0.0
      %93 = vst [vmem:[#allocation2 + $0x140] sm:$0xff] 0.0
      %94 = vst [vmem:[#allocation2 + $0x148] sm:$0xff] 0.0
      %95 = vst [vmem:[#allocation2 + $0x150] sm:$0xff] 0.0
      %96 = vst [vmem:[#allocation2 + $0x158] sm:$0xff] 0.0
      %97 = vst [vmem:[#allocation2 + $0x160] sm:$0xff] 0.0
      %98 = vst [vmem:[#allocation2 + $0x168] sm:$0xff] 0.0
      %99 = vst [vmem:[#allocation2 + $0x170] sm:$0xff] 0.0
      %100 = vst [vmem:[#allocation2 + $0x178] sm:$0xff] 0.0
      %101 = vst [vmem:[#allocation2 + $0x180] sm:$0xff] 0.0
      %102 = vst [vmem:[#allocation2 + $0x188] sm:$0xff] 0.0
      %103 = vst [vmem:[#allocation2 + $0x190] sm:$0xff] 0.0
      %104 = vst [vmem:[#allocation2 + $0x198] sm:$0xff] 0.0
      %105 = vst [vmem:[#allocation2 + $0x1a0] sm:$0xff] 0.0
      %106 = vst [vmem:[#allocation2 + $0x1a8] sm:$0xff] 0.0
      %107 = vst [vmem:[#allocation2 + $0x1b0] sm:$0xff] 0.0
      %108 = vst [vmem:[#allocation2 + $0x1b8] sm:$0xff] 0.0
      %109 = vst [vmem:[#allocation2 + $0x1c0] sm:$0xff] 0.0
      %110 = vst [vmem:[#allocation2 + $0x1c8] sm:$0xff] 0.0
      %111 = vst [vmem:[#allocation2 + $0x1d0] sm:$0xff] 0.0
      %112 = vst [vmem:[#allocation2 + $0x1d8] sm:$0xff] 0.0
      %113 = vst [vmem:[#allocation2 + $0x1e0] sm:$0xff] 0.0
      %114 = vst [vmem:[#allocation2 + $0x1e8] sm:$0xff] 0.0
      %115 = vst [vmem:[#allocation2 + $0x1f0] sm:$0xff] 0.0
      %116 = vst [vmem:[#allocation2 + $0x1f8] sm:$0xff] 0.0
    $region33: #{tpu_custom_call.1} parent=1 // pred_fallthru
      _
    %v117 = vld [vmem:[#allocation2] sm:$0xff]
    %v118 = vld [vmem:[#allocation2 + $0x8] sm:$0xff]
    %v119 = vld [vmem:[#allocation2 + $0x10] sm:$0xff]
    %v120 = vld [vmem:[#allocation2 + $0x18] sm:$0xff]
    %v121 = vld [vmem:[#allocation2 + $0x20] sm:$0xff]
    %v122 = vld [vmem:[#allocation2 + $0x28] sm:$0xff]
    %v123 = vld [vmem:[#allocation2 + $0x30] sm:$0xff]
    %v124 = vld [vmem:[#allocation2 + $0x38] sm:$0xff]
    %v125 = vld [vmem:[#allocation2 + $0x40] sm:$0xff]
    %v126 = vld [vmem:[#allocation2 + $0x48] sm:$0xff]
    %v127 = vld [vmem:[#allocation2 + $0x50] sm:$0xff]
    %v128 = vld [vmem:[#allocation2 + $0x58] sm:$0xff]
    %v129 = vld [vmem:[#allocation2 + $0x60] sm:$0xff]
    %v130 = vld [vmem:[#allocation2 + $0x68] sm:$0xff]
    %v131 = vld [vmem:[#allocation2 + $0x70] sm:$0xff]
    %v132 = vld [vmem:[#allocation2 + $0x78] sm:$0xff]
    %v133 = vld [vmem:[#allocation2 + $0x80] sm:$0xff]
    %v134 = vld [vmem:[#allocation2 + $0x88] sm:$0xff]
    %v135 = vld [vmem:[#allocation2 + $0x90] sm:$0xff]
    %v136 = vld [vmem:[#allocation2 + $0x98] sm:$0xff]
    %v137 = vld [vmem:[#allocation2 + $0xa0] sm:$0xff]
    %v138 = vld [vmem:[#allocation2 + $0xa8] sm:$0xff]
    %v139 = vld [vmem:[#allocation2 + $0xb0] sm:$0xff]
    %v140 = vld [vmem:[#allocation2 + $0xb8] sm:$0xff]
    %v141 = vld [vmem:[#allocation2 + $0xc0] sm:$0xff]
    %v142 = vld [vmem:[#allocation2 + $0xc8] sm:$0xff]
    %v143 = vld [vmem:[#allocation2 + $0xd0] sm:$0xff]
    %v144 = vld [vmem:[#allocation2 + $0xd8] sm:$0xff]
    %v145 = vld [vmem:[#allocation2 + $0xe0] sm:$0xff]
    %v146 = vld [vmem:[#allocation2 + $0xe8] sm:$0xff]
    %v147 = vld [vmem:[#allocation2 + $0xf0] sm:$0xff]
    %v148 = vld [vmem:[#allocation2 + $0xf8] sm:$0xff]
    %v149 = vld [vmem:[#allocation2 + $0x100] sm:$0xff]
    %v150 = vld [vmem:[#allocation2 + $0x108] sm:$0xff]
    %v151 = vld [vmem:[#allocation2 + $0x110] sm:$0xff]
    %v152 = vld [vmem:[#allocation2 + $0x118] sm:$0xff]
    %v153 = vld [vmem:[#allocation2 + $0x120] sm:$0xff]
    %v154 = vld [vmem:[#allocation2 + $0x128] sm:$0xff]
    %v155 = vld [vmem:[#allocation2 + $0x130] sm:$0xff]
    %v156 = vld [vmem:[#allocation2 + $0x138] sm:$0xff]
    %v157 = vld [vmem:[#allocation2 + $0x140] sm:$0xff]
    %v158 = vld [vmem:[#allocation2 + $0x148] sm:$0xff]
    %v159 = vld [vmem:[#allocation2 + $0x150] sm:$0xff]
    %v160 = vld [vmem:[#allocation2 + $0x158] sm:$0xff]
    %v161 = vld [vmem:[#allocation2 + $0x160] sm:$0xff]
    %v162 = vld [vmem:[#allocation2 + $0x168] sm:$0xff]
    %v163 = vld [vmem:[#allocation2 + $0x170] sm:$0xff]
    %v164 = vld [vmem:[#allocation2 + $0x178] sm:$0xff]
    %v165 = vld [vmem:[#allocation2 + $0x180] sm:$0xff]
    %v166 = vld [vmem:[#allocation2 + $0x188] sm:$0xff]
    %v167 = vld [vmem:[#allocation2 + $0x190] sm:$0xff]
    %v168 = vld [vmem:[#allocation2 + $0x198] sm:$0xff]
    %v169 = vld [vmem:[#allocation2 + $0x1a0] sm:$0xff]
    %v170 = vld [vmem:[#allocation2 + $0x1a8] sm:$0xff]
    %v171 = vld [vmem:[#allocation2 + $0x1b0] sm:$0xff]
    %v172 = vld [vmem:[#allocation2 + $0x1b8] sm:$0xff]
    %v173 = vld [vmem:[#allocation2 + $0x1c0] sm:$0xff]
    %v174 = vld [vmem:[#allocation2 + $0x1c8] sm:$0xff]
    %v175 = vld [vmem:[#allocation2 + $0x1d0] sm:$0xff]
    %v176 = vld [vmem:[#allocation2 + $0x1d8] sm:$0xff]
    %v177 = vld [vmem:[#allocation2 + $0x1e0] sm:$0xff]
    %v178 = vld [vmem:[#allocation2 + $0x1e8] sm:$0xff]
    %v179 = vld [vmem:[#allocation2 + $0x1f0] sm:$0xff]
    %v180 = vld [vmem:[#allocation2 + $0x1f8] sm:$0xff]
    %v181 = vld [vmem:[#allocation3] sm:$0xff]
    %v182 = vld [vmem:[#allocation3 + $0x8] sm:$0xff]
    %v183 = vld [vmem:[#allocation3 + $0x10] sm:$0xff]
    %v184 = vld [vmem:[#allocation3 + $0x18] sm:$0xff]
    %v185 = vld [vmem:[#allocation3 + $0x20] sm:$0xff]
    %v186 = vld [vmem:[#allocation3 + $0x28] sm:$0xff]
    %v187 = vld [vmem:[#allocation3 + $0x30] sm:$0xff]
    %v188 = vld [vmem:[#allocation3 + $0x38] sm:$0xff]
    %v189 = vld [vmem:[#allocation3 + $0x40] sm:$0xff]
    %v190 = vld [vmem:[#allocation3 + $0x48] sm:$0xff]
    %v191 = vld [vmem:[#allocation3 + $0x50] sm:$0xff]
    %v192 = vld [vmem:[#allocation3 + $0x58] sm:$0xff]
    %v193 = vld [vmem:[#allocation3 + $0x60] sm:$0xff]
    %v194 = vld [vmem:[#allocation3 + $0x68] sm:$0xff]
    %v195 = vld [vmem:[#allocation3 + $0x70] sm:$0xff]
    %v196 = vld [vmem:[#allocation3 + $0x78] sm:$0xff]
    %v197 = vld [vmem:[#allocation3 + $0x80] sm:$0xff]
    %v198 = vld [vmem:[#allocation3 + $0x88] sm:$0xff]
    %v199 = vld [vmem:[#allocation3 + $0x90] sm:$0xff]
    %v200 = vld [vmem:[#allocation3 + $0x98] sm:$0xff]
    %v201 = vld [vmem:[#allocation3 + $0xa0] sm:$0xff]
    %v202 = vld [vmem:[#allocation3 + $0xa8] sm:$0xff]
    %v203 = vld [vmem:[#allocation3 + $0xb0] sm:$0xff]
    %v204 = vld [vmem:[#allocation3 + $0xb8] sm:$0xff]
    %v205 = vld [vmem:[#allocation3 + $0xc0] sm:$0xff]
    %v206 = vld [vmem:[#allocation3 + $0xc8] sm:$0xff]
    %v207 = vld [vmem:[#allocation3 + $0xd0] sm:$0xff]
    %v208 = vld [vmem:[#allocation3 + $0xd8] sm:$0xff]
    %v209 = vld [vmem:[#allocation3 + $0xe0] sm:$0xff]
    %v210 = vld [vmem:[#allocation3 + $0xe8] sm:$0xff]
    %v211 = vld [vmem:[#allocation3 + $0xf0] sm:$0xff]
    %v212 = vld [vmem:[#allocation3 + $0xf8] sm:$0xff]
    %v213 = vld [vmem:[#allocation3 + $0x100] sm:$0xff]
    %v214 = vld [vmem:[#allocation3 + $0x108] sm:$0xff]
    %v215 = vld [vmem:[#allocation3 + $0x110] sm:$0xff]
    %v216 = vld [vmem:[#allocation3 + $0x118] sm:$0xff]
    %v217 = vld [vmem:[#allocation3 + $0x120] sm:$0xff]
    %v218 = vld [vmem:[#allocation3 + $0x128] sm:$0xff]
    %v219 = vld [vmem:[#allocation3 + $0x130] sm:$0xff]
    %v220 = vld [vmem:[#allocation3 + $0x138] sm:$0xff]
    %v221 = vld [vmem:[#allocation3 + $0x140] sm:$0xff]
    %v222 = vld [vmem:[#allocation3 + $0x148] sm:$0xff]
    %v223 = vld [vmem:[#allocation3 + $0x150] sm:$0xff]
    %v224 = vld [vmem:[#allocation3 + $0x158] sm:$0xff]
    %v225 = vld [vmem:[#allocation3 + $0x160] sm:$0xff]
    %v226 = vld [vmem:[#allocation3 + $0x168] sm:$0xff]
    %v227 = vld [vmem:[#allocation3 + $0x170] sm:$0xff]
    %v228 = vld [vmem:[#allocation3 + $0x178] sm:$0xff]
    %v229 = vld [vmem:[#allocation3 + $0x180] sm:$0xff]
    %v230 = vld [vmem:[#allocation3 + $0x188] sm:$0xff]
    %v231 = vld [vmem:[#allocation3 + $0x190] sm:$0xff]
    %v232 = vld [vmem:[#allocation3 + $0x198] sm:$0xff]
    %v233 = vld [vmem:[#allocation3 + $0x1a0] sm:$0xff]
    %v234 = vld [vmem:[#allocation3 + $0x1a8] sm:$0xff]
    %v235 = vld [vmem:[#allocation3 + $0x1b0] sm:$0xff]
    %v236 = vld [vmem:[#allocation3 + $0x1b8] sm:$0xff]
    %v237 = vld [vmem:[#allocation3 + $0x1c0] sm:$0xff]
    %v238 = vld [vmem:[#allocation3 + $0x1c8] sm:$0xff]
    %v239 = vld [vmem:[#allocation3 + $0x1d0] sm:$0xff]
    %v240 = vld [vmem:[#allocation3 + $0x1d8] sm:$0xff]
    %v241 = vld [vmem:[#allocation3 + $0x1e0] sm:$0xff]
    %v242 = vld [vmem:[#allocation3 + $0x1e8] sm:$0xff]
    %v243 = vld [vmem:[#allocation3 + $0x1f0] sm:$0xff]
    %v244 = vld [vmem:[#allocation3 + $0x1f8] sm:$0xff]
    %v245 = vadd.f32 %v117, %v181
    %v246 = vadd.f32 %v118, %v182
    %v247 = vadd.f32 %v119, %v183
    %v248 = vadd.f32 %v120, %v184
    %v249 = vadd.f32 %v121, %v185
    %v250 = vadd.f32 %v122, %v186
    %v251 = vadd.f32 %v123, %v187
    %v252 = vadd.f32 %v124, %v188
    %v253 = vadd.f32 %v125, %v189
    %v254 = vadd.f32 %v126, %v190
    %v255 = vadd.f32 %v127, %v191
    %v256 = vadd.f32 %v128, %v192
    %v257 = vadd.f32 %v129, %v193
    %v258 = vadd.f32 %v130, %v194
    %v259 = vadd.f32 %v131, %v195
    %v260 = vadd.f32 %v132, %v196
    %v261 = vadd.f32 %v133, %v197
    %v262 = vadd.f32 %v134, %v198
    %v263 = vadd.f32 %v135, %v199
    %v264 = vadd.f32 %v136, %v200
    %v265 = vadd.f32 %v137, %v201
    %v266 = vadd.f32 %v138, %v202
    %v267 = vadd.f32 %v139, %v203
    %v268 = vadd.f32 %v140, %v204
    %v269 = vadd.f32 %v141, %v205
    %v270 = vadd.f32 %v142, %v206
    %v271 = vadd.f32 %v143, %v207
    %v272 = vadd.f32 %v144, %v208
    %v273 = vadd.f32 %v145, %v209
    %v274 = vadd.f32 %v146, %v210
    %v275 = vadd.f32 %v147, %v211
    %v276 = vadd.f32 %v148, %v212
    %v277 = vadd.f32 %v149, %v213
    %v278 = vadd.f32 %v150, %v214
    %v279 = vadd.f32 %v151, %v215
    %v280 = vadd.f32 %v152, %v216
    %v281 = vadd.f32 %v153, %v217
    %v282 = vadd.f32 %v154, %v218
    %v283 = vadd.f32 %v155, %v219
    %v284 = vadd.f32 %v156, %v220
    %v285 = vadd.f32 %v157, %v221
    %v286 = vadd.f32 %v158, %v222
    %v287 = vadd.f32 %v159, %v223
    %v288 = vadd.f32 %v160, %v224
    %v289 = vadd.f32 %v161, %v225
    %v290 = vadd.f32 %v162, %v226
    %v291 = vadd.f32 %v163, %v227
    %v292 = vadd.f32 %v164, %v228
    %v293 = vadd.f32 %v165, %v229
    %v294 = vadd.f32 %v166, %v230
    %v295 = vadd.f32 %v167, %v231
    %v296 = vadd.f32 %v168, %v232
    %v297 = vadd.f32 %v169, %v233
    %v298 = vadd.f32 %v170, %v234
    %v299 = vadd.f32 %v171, %v235
    %v300 = vadd.f32 %v172, %v236
    %v301 = vadd.f32 %v173, %v237
    %v302 = vadd.f32 %v174, %v238
    %v303 = vadd.f32 %v175, %v239
    %v304 = vadd.f32 %v176, %v240
    %v305 = vadd.f32 %v177, %v241
    %v306 = vadd.f32 %v178, %v242
    %v307 = vadd.f32 %v179, %v243
    %v308 = vadd.f32 %v180, %v244
    %309 = vst [vmem:[#allocation2] sm:$0xff] %v245
    %310 = vst [vmem:[#allocation2 + $0x8] sm:$0xff] %v246
    %311 = vst [vmem:[#allocation2 + $0x10] sm:$0xff] %v247
    %312 = vst [vmem:[#allocation2 + $0x18] sm:$0xff] %v248
    %313 = vst [vmem:[#allocation2 + $0x20] sm:$0xff] %v249
    %314 = vst [vmem:[#allocation2 + $0x28] sm:$0xff] %v250
    %315 = vst [vmem:[#allocation2 + $0x30] sm:$0xff] %v251
    %316 = vst [vmem:[#allocation2 + $0x38] sm:$0xff] %v252
    %317 = vst [vmem:[#allocation2 + $0x40] sm:$0xff] %v253
    %318 = vst [vmem:[#allocation2 + $0x48] sm:$0xff] %v254
    %319 = vst [vmem:[#allocation2 + $0x50] sm:$0xff] %v255
    %320 = vst [vmem:[#allocation2 + $0x58] sm:$0xff] %v256
    %321 = vst [vmem:[#allocation2 + $0x60] sm:$0xff] %v257
    %322 = vst [vmem:[#allocation2 + $0x68] sm:$0xff] %v258
    %323 = vst [vmem:[#allocation2 + $0x70] sm:$0xff] %v259
    %324 = vst [vmem:[#allocation2 + $0x78] sm:$0xff] %v260
    %325 = vst [vmem:[#allocation2 + $0x80] sm:$0xff] %v261
    %326 = vst [vmem:[#allocation2 + $0x88] sm:$0xff] %v262
    %327 = vst [vmem:[#allocation2 + $0x90] sm:$0xff] %v263
    %328 = vst [vmem:[#allocation2 + $0x98] sm:$0xff] %v264
    %329 = vst [vmem:[#allocation2 + $0xa0] sm:$0xff] %v265
    %330 = vst [vmem:[#allocation2 + $0xa8] sm:$0xff] %v266
    %331 = vst [vmem:[#allocation2 + $0xb0] sm:$0xff] %v267
    %332 = vst [vmem:[#allocation2 + $0xb8] sm:$0xff] %v268
    %333 = vst [vmem:[#allocation2 + $0xc0] sm:$0xff] %v269
    %334 = vst [vmem:[#allocation2 + $0xc8] sm:$0xff] %v270
    %335 = vst [vmem:[#allocation2 + $0xd0] sm:$0xff] %v271
    %336 = vst [vmem:[#allocation2 + $0xd8] sm:$0xff] %v272
    %337 = vst [vmem:[#allocation2 + $0xe0] sm:$0xff] %v273
    %338 = vst [vmem:[#allocation2 + $0xe8] sm:$0xff] %v274
    %339 = vst [vmem:[#allocation2 + $0xf0] sm:$0xff] %v275
    %340 = vst [vmem:[#allocation2 + $0xf8] sm:$0xff] %v276
    %341 = vst [vmem:[#allocation2 + $0x100] sm:$0xff] %v277
    %342 = vst [vmem:[#allocation2 + $0x108] sm:$0xff] %v278
    %343 = vst [vmem:[#allocation2 + $0x110] sm:$0xff] %v279
    %344 = vst [vmem:[#allocation2 + $0x118] sm:$0xff] %v280
    %345 = vst [vmem:[#allocation2 + $0x120] sm:$0xff] %v281
    %346 = vst [vmem:[#allocation2 + $0x128] sm:$0xff] %v282
    %347 = vst [vmem:[#allocation2 + $0x130] sm:$0xff] %v283
    %348 = vst [vmem:[#allocation2 + $0x138] sm:$0xff] %v284
    %349 = vst [vmem:[#allocation2 + $0x140] sm:$0xff] %v285
    %350 = vst [vmem:[#allocation2 + $0x148] sm:$0xff] %v286
    %351 = vst [vmem:[#allocation2 + $0x150] sm:$0xff] %v287
    %352 = vst [vmem:[#allocation2 + $0x158] sm:$0xff] %v288
    %353 = vst [vmem:[#allocation2 + $0x160] sm:$0xff] %v289
    %354 = vst [vmem:[#allocation2 + $0x168] sm:$0xff] %v290
    %355 = vst [vmem:[#allocation2 + $0x170] sm:$0xff] %v291
    %356 = vst [vmem:[#allocation2 + $0x178] sm:$0xff] %v292
    %357 = vst [vmem:[#allocation2 + $0x180] sm:$0xff] %v293
    %358 = vst [vmem:[#allocation2 + $0x188] sm:$0xff] %v294
    %359 = vst [vmem:[#allocation2 + $0x190] sm:$0xff] %v295
    %360 = vst [vmem:[#allocation2 + $0x198] sm:$0xff] %v296
    %361 = vst [vmem:[#allocation2 + $0x1a0] sm:$0xff] %v297
    %362 = vst [vmem:[#allocation2 + $0x1a8] sm:$0xff] %v298
    %363 = vst [vmem:[#allocation2 + $0x1b0] sm:$0xff] %v299
    %364 = vst [vmem:[#allocation2 + $0x1b8] sm:$0xff] %v300
    %365 = vst [vmem:[#allocation2 + $0x1c0] sm:$0xff] %v301
    %366 = vst [vmem:[#allocation2 + $0x1c8] sm:$0xff] %v302
    %367 = vst [vmem:[#allocation2 + $0x1d0] sm:$0xff] %v303
    %368 = vst [vmem:[#allocation2 + $0x1d8] sm:$0xff] %v304
    %369 = vst [vmem:[#allocation2 + $0x1e0] sm:$0xff] %v305
    %370 = vst [vmem:[#allocation2 + $0x1e8] sm:$0xff] %v306
    %371 = vst [vmem:[#allocation2 + $0x1f0] sm:$0xff] %v307
    %372 = vst [vmem:[#allocation2 + $0x1f8] sm:$0xff] %v308
    // Predicated region
    $region34: #{tpu_custom_call.1} parent=1 // pred_check
      %p373 = pneg %p49
    $region35: #{tpu_custom_call.1} parent=1 // pred_check_branch
      %375 = sbr.rel (%p373) target = $region37
    $region36: #{tpu_custom_call.1} parent=1 // pred_region
      %v376 = vld [vmem:[#allocation2] sm:$0xff]
      %v377 = vld [vmem:[#allocation2 + $0x8] sm:$0xff]
      %v378 = vld [vmem:[#allocation2 + $0x10] sm:$0xff]
      %v379 = vld [vmem:[#allocation2 + $0x18] sm:$0xff]
      %v380 = vld [vmem:[#allocation2 + $0x20] sm:$0xff]
      %v381 = vld [vmem:[#allocation2 + $0x28] sm:$0xff]
      %v382 = vld [vmem:[#allocation2 + $0x30] sm:$0xff]
      %v383 = vld [vmem:[#allocation2 + $0x38] sm:$0xff]
      %v384 = vld [vmem:[#allocation2 + $0x40] sm:$0xff]
      %v385 = vld [vmem:[#allocation2 + $0x48] sm:$0xff]
      %v386 = vld [vmem:[#allocation2 + $0x50] sm:$0xff]
      %v387 = vld [vmem:[#allocation2 + $0x58] sm:$0xff]
      %v388 = vld [vmem:[#allocation2 + $0x60] sm:$0xff]
      %v389 = vld [vmem:[#allocation2 + $0x68] sm:$0xff]
      %v390 = vld [vmem:[#allocation2 + $0x70] sm:$0xff]
      %v391 = vld [vmem:[#allocation2 + $0x78] sm:$0xff]
      %v392 = vld [vmem:[#allocation2 + $0x80] sm:$0xff]
      %v393 = vld [vmem:[#allocation2 + $0x88] sm:$0xff]
      %v394 = vld [vmem:[#allocation2 + $0x90] sm:$0xff]
      %v395 = vld [vmem:[#allocation2 + $0x98] sm:$0xff]
      %v396 = vld [vmem:[#allocation2 + $0xa0] sm:$0xff]
      %v397 = vld [vmem:[#allocation2 + $0xa8] sm:$0xff]
      %v398 = vld [vmem:[#allocation2 + $0xb0] sm:$0xff]
      %v399 = vld [vmem:[#allocation2 + $0xb8] sm:$0xff]
      %v400 = vld [vmem:[#allocation2 + $0xc0] sm:$0xff]
      %v401 = vld [vmem:[#allocation2 + $0xc8] sm:$0xff]
      %v402 = vld [vmem:[#allocation2 + $0xd0] sm:$0xff]
      %v403 = vld [vmem:[#allocation2 + $0xd8] sm:$0xff]
      %v404 = vld [vmem:[#allocation2 + $0xe0] sm:$0xff]
      %v405 = vld [vmem:[#allocation2 + $0xe8] sm:$0xff]
      %v406 = vld [vmem:[#allocation2 + $0xf0] sm:$0xff]
      %v407 = vld [vmem:[#allocation2 + $0xf8] sm:$0xff]
      %v408 = vld [vmem:[#allocation2 + $0x100] sm:$0xff]
      %v409 = vld [vmem:[#allocation2 + $0x108] sm:$0xff]
      %v410 = vld [vmem:[#allocation2 + $0x110] sm:$0xff]
      %v411 = vld [vmem:[#allocation2 + $0x118] sm:$0xff]
      %v412 = vld [vmem:[#allocation2 + $0x120] sm:$0xff]
      %v413 = vld [vmem:[#allocation2 + $0x128] sm:$0xff]
      %v414 = vld [vmem:[#allocation2 + $0x130] sm:$0xff]
      %v415 = vld [vmem:[#allocation2 + $0x138] sm:$0xff]
      %v416 = vld [vmem:[#allocation2 + $0x140] sm:$0xff]
      %v417 = vld [vmem:[#allocation2 + $0x148] sm:$0xff]
      %v418 = vld [vmem:[#allocation2 + $0x150] sm:$0xff]
      %v419 = vld [vmem:[#allocation2 + $0x158] sm:$0xff]
      %v420 = vld [vmem:[#allocation2 + $0x160] sm:$0xff]
      %v421 = vld [vmem:[#allocation2 + $0x168] sm:$0xff]
      %v422 = vld [vmem:[#allocation2 + $0x170] sm:$0xff]
      %v423 = vld [vmem:[#allocation2 + $0x178] sm:$0xff]
      %v424 = vld [vmem:[#allocation2 + $0x180] sm:$0xff]
      %v425 = vld [vmem:[#allocation2 + $0x188] sm:$0xff]
      %v426 = vld [vmem:[#allocation2 + $0x190] sm:$0xff]
      %v427 = vld [vmem:[#allocation2 + $0x198] sm:$0xff]
      %v428 = vld [vmem:[#allocation2 + $0x1a0] sm:$0xff]
      %v429 = vld [vmem:[#allocation2 + $0x1a8] sm:$0xff]
      %v430 = vld [vmem:[#allocation2 + $0x1b0] sm:$0xff]
      %v431 = vld [vmem:[#allocation2 + $0x1b8] sm:$0xff]
      %v432 = vld [vmem:[#allocation2 + $0x1c0] sm:$0xff]
      %v433 = vld [vmem:[#allocation2 + $0x1c8] sm:$0xff]
      %v434 = vld [vmem:[#allocation2 + $0x1d0] sm:$0xff]
      %v435 = vld [vmem:[#allocation2 + $0x1d8] sm:$0xff]
      %v436 = vld [vmem:[#allocation2 + $0x1e0] sm:$0xff]
      %v437 = vld [vmem:[#allocation2 + $0x1e8] sm:$0xff]
      %v438 = vld [vmem:[#allocation2 + $0x1f0] sm:$0xff]
      %v439 = vld [vmem:[#allocation2 + $0x1f8] sm:$0xff]
      %v440 = vadd.f32 %v376, %v377
      %441 = vadd.xlane.f32.xlu0 %v440
      %v442 = vpop.xlane.xlu0 %441
      %v443 = vadd.f32 %v378, %v379
      %444 = vadd.xlane.f32.xlu0 %v443
      %v445 = vpop.xlane.xlu0 %444
      %v446 = vadd.f32 %v380, %v381
      %447 = vadd.xlane.f32.xlu0 %v446
      %v448 = vpop.xlane.xlu0 %447
      %v449 = vadd.f32 %v382, %v383
      %450 = vadd.xlane.f32.xlu0 %v449
      %v451 = vpop.xlane.xlu0 %450
      %v452 = vadd.f32 %v384, %v385
      %453 = vadd.xlane.f32.xlu0 %v452
      %v454 = vpop.xlane.xlu0 %453
      %v455 = vadd.f32 %v386, %v387
      %456 = vadd.xlane.f32.xlu0 %v455
      %v457 = vpop.xlane.xlu0 %456
      %v458 = vadd.f32 %v388, %v389
      %459 = vadd.xlane.f32.xlu0 %v458
      %v460 = vpop.xlane.xlu0 %459
      %v461 = vadd.f32 %v390, %v391
      %462 = vadd.xlane.f32.xlu0 %v461
      %v463 = vpop.xlane.xlu0 %462
      %v464 = vadd.f32 %v392, %v393
      %465 = vadd.xlane.f32.xlu0 %v464
      %v466 = vpop.xlane.xlu0 %465
      %v467 = vadd.f32 %v394, %v395
      %468 = vadd.xlane.f32.xlu0 %v467
      %v469 = vpop.xlane.xlu0 %468
      %v470 = vadd.f32 %v396, %v397
      %471 = vadd.xlane.f32.xlu0 %v470
      %v472 = vpop.xlane.xlu0 %471
      %v473 = vadd.f32 %v398, %v399
      %474 = vadd.xlane.f32.xlu0 %v473
      %v475 = vpop.xlane.xlu0 %474
      %v476 = vadd.f32 %v400, %v401
      %477 = vadd.xlane.f32.xlu0 %v476
      %v478 = vpop.xlane.xlu0 %477
      %v479 = vadd.f32 %v402, %v403
      %480 = vadd.xlane.f32.xlu0 %v479
      %v481 = vpop.xlane.xlu0 %480
      %v482 = vadd.f32 %v404, %v405
      %483 = vadd.xlane.f32.xlu0 %v482
      %v484 = vpop.xlane.xlu0 %483
      %v485 = vadd.f32 %v406, %v407
      %486 = vadd.xlane.f32.xlu0 %v485
      %v487 = vpop.xlane.xlu0 %486
      %v488 = vadd.f32 %v408, %v409
      %489 = vadd.xlane.f32.xlu0 %v488
      %v490 = vpop.xlane.xlu0 %489
      %v491 = vadd.f32 %v410, %v411
      %492 = vadd.xlane.f32.xlu0 %v491
      %v493 = vpop.xlane.xlu0 %492
      %v494 = vadd.f32 %v412, %v413
      %495 = vadd.xlane.f32.xlu0 %v494
      %v496 = vpop.xlane.xlu0 %495
      %v497 = vadd.f32 %v414, %v415
      %498 = vadd.xlane.f32.xlu0 %v497
      %v499 = vpop.xlane.xlu0 %498
      %v500 = vadd.f32 %v416, %v417
      %501 = vadd.xlane.f32.xlu0 %v500
      %v502 = vpop.xlane.xlu0 %501
      %v503 = vadd.f32 %v418, %v419
      %504 = vadd.xlane.f32.xlu0 %v503
      %v505 = vpop.xlane.xlu0 %504
      %v506 = vadd.f32 %v420, %v421
      %507 = vadd.xlane.f32.xlu0 %v506
      %v508 = vpop.xlane.xlu0 %507
      %v509 = vadd.f32 %v422, %v423
      %510 = vadd.xlane.f32.xlu0 %v509
      %v511 = vpop.xlane.xlu0 %510
      %v512 = vadd.f32 %v424, %v425
      %513 = vadd.xlane.f32.xlu0 %v512
      %v514 = vpop.xlane.xlu0 %513
      %v515 = vadd.f32 %v426, %v427
      %516 = vadd.xlane.f32.xlu0 %v515
      %v517 = vpop.xlane.xlu0 %516
      %v518 = vadd.f32 %v428, %v429
      %519 = vadd.xlane.f32.xlu0 %v518
      %v520 = vpop.xlane.xlu0 %519
      %v521 = vadd.f32 %v430, %v431
      %522 = vadd.xlane.f32.xlu0 %v521
      %v523 = vpop.xlane.xlu0 %522
      %v524 = vadd.f32 %v432, %v433
      %525 = vadd.xlane.f32.xlu0 %v524
      %v526 = vpop.xlane.xlu0 %525
      %v527 = vadd.f32 %v434, %v435
      %528 = vadd.xlane.f32.xlu0 %v527
      %v529 = vpop.xlane.xlu0 %528
      %v530 = vadd.f32 %v436, %v437
      %531 = vadd.xlane.f32.xlu0 %v530
      %v532 = vpop.xlane.xlu0 %531
      %v533 = vadd.f32 %v438, %v439
      %534 = vadd.xlane.f32.xlu0 %v533
      %v535 = vpop.xlane.xlu0 %534
      %v536 = vmul.f32 %v442, 0.00390625
      %v537 = vmul.f32 %v445, 0.00390625
      %v538 = vmul.f32 %v448, 0.00390625
      %v539 = vmul.f32 %v451, 0.00390625
      %v540 = vmul.f32 %v454, 0.00390625
      %v541 = vmul.f32 %v457, 0.00390625
      %v542 = vmul.f32 %v460, 0.00390625
      %v543 = vmul.f32 %v463, 0.00390625
      %v544 = vmul.f32 %v466, 0.00390625
      %v545 = vmul.f32 %v469, 0.00390625
      %v546 = vmul.f32 %v472, 0.00390625
      %v547 = vmul.f32 %v475, 0.00390625
      %v548 = vmul.f32 %v478, 0.00390625
      %v549 = vmul.f32 %v481, 0.00390625
      %v550 = vmul.f32 %v484, 0.00390625
      %v551 = vmul.f32 %v487, 0.00390625
      %v552 = vmul.f32 %v490, 0.00390625
      %v553 = vmul.f32 %v493, 0.00390625
      %v554 = vmul.f32 %v496, 0.00390625
      %v555 = vmul.f32 %v499, 0.00390625
      %v556 = vmul.f32 %v502, 0.00390625
      %v557 = vmul.f32 %v505, 0.00390625
      %v558 = vmul.f32 %v508, 0.00390625
      %v559 = vmul.f32 %v511, 0.00390625
      %v560 = vmul.f32 %v514, 0.00390625
      %v561 = vmul.f32 %v517, 0.00390625
      %v562 = vmul.f32 %v520, 0.00390625
      %v563 = vmul.f32 %v523, 0.00390625
      %v564 = vmul.f32 %v526, 0.00390625
      %v565 = vmul.f32 %v529, 0.00390625
      %v566 = vmul.f32 %v532, 0.00390625
      %v567 = vmul.f32 %v535, 0.00390625
      %v600 = vlaneseq
      %v601 = vand.u32 %v600, 127
      %v602 = vlaneseq
      %v603 = vshrl.u32 %v602, 7
      %v604 = vsub.s32 %v601, %v603
      %v605 = vrot.slane %v536, %v604
      %v606 = vadd.s32 %v601, 4294967288
      %v607 = vlaneseq
      %v608 = vshrl.u32 %v607, 7
      %v609 = vsub.s32 %v606, %v608
      %v610 = vrot.slane %v537, %v609
      %vm611 = vcmask 130112
      %v612 = vsel %vm611, %v610, %v605
      %v613 = vadd.s32 %v601, 4294967280
      %v614 = vlaneseq
      %v615 = vshrl.u32 %v614, 7
      %v616 = vsub.s32 %v613, %v615
      %v617 = vrot.slane %v538, %v616
      %vm618 = vcmask 195712
      %v619 = vsel %vm618, %v617, %v612
      %v620 = vadd.s32 %v601, 4294967272
      %v621 = vlaneseq
      %v622 = vshrl.u32 %v621, 7
      %v623 = vsub.s32 %v620, %v622
      %v624 = vrot.slane %v539, %v623
      %vm625 = vcmask 261312
      %v626 = vsel %vm625, %v624, %v619
      %v627 = vlaneseq
      %v628 = vshrl.u32 %v627, 7
      %v629 = vsub.s32 %v601, %v628
      %v630 = vrot.slane %v540, %v629
      %v631 = vlaneseq
      %v632 = vshrl.u32 %v631, 7
      %v633 = vsub.s32 %v606, %v632
      %v634 = vrot.slane %v541, %v633
      %v635 = vsel %vm611, %v634, %v630
      %v636 = vlaneseq
      %v637 = vshrl.u32 %v636, 7
      %v638 = vsub.s32 %v613, %v637
      %v639 = vrot.slane %v542, %v638
      %v640 = vsel %vm618, %v639, %v635
      %v641 = vlaneseq
      %v642 = vshrl.u32 %v641, 7
      %v643 = vsub.s32 %v620, %v642
      %v644 = vrot.slane %v543, %v643
      %v645 = vsel %vm625, %v644, %v640
      %v646 = vlaneseq
      %v647 = vshrl.u32 %v646, 7
      %v648 = vsub.s32 %v601, %v647
      %v649 = vrot.slane %v544, %v648
      %v650 = vlaneseq
      %v651 = vshrl.u32 %v650, 7
      %v652 = vsub.s32 %v606, %v651
      %v653 = vrot.slane %v545, %v652
      %v654 = vsel %vm611, %v653, %v649
      %v655 = vlaneseq
      %v656 = vshrl.u32 %v655, 7
      %v657 = vsub.s32 %v613, %v656
      %v658 = vrot.slane %v546, %v657
      %v659 = vsel %vm618, %v658, %v654
      %v660 = vlaneseq
      %v661 = vshrl.u32 %v660, 7
      %v662 = vsub.s32 %v620, %v661
      %v663 = vrot.slane %v547, %v662
      %v664 = vsel %vm625, %v663, %v659
      %v665 = vlaneseq
      %v666 = vshrl.u32 %v665, 7
      %v667 = vsub.s32 %v601, %v666
      %v668 = vrot.slane %v548, %v667
      %v669 = vlaneseq
      %v670 = vshrl.u32 %v669, 7
      %v671 = vsub.s32 %v606, %v670
      %v672 = vrot.slane %v549, %v671
      %v673 = vsel %vm611, %v672, %v668
      %v674 = vlaneseq
      %v675 = vshrl.u32 %v674, 7
      %v676 = vsub.s32 %v613, %v675
      %v677 = vrot.slane %v550, %v676
      %v678 = vsel %vm618, %v677, %v673
      %v679 = vlaneseq
      %v680 = vshrl.u32 %v679, 7
      %v681 = vsub.s32 %v620, %v680
      %v682 = vrot.slane %v551, %v681
      %v683 = vsel %vm625, %v682, %v678
      %v684 = vlaneseq
      %v685 = vshrl.u32 %v684, 7
      %v686 = vsub.s32 %v601, %v685
      %v687 = vrot.slane %v552, %v686
      %v688 = vlaneseq
      %v689 = vshrl.u32 %v688, 7
      %v690 = vsub.s32 %v606, %v689
      %v691 = vrot.slane %v553, %v690
      %v692 = vsel %vm611, %v691, %v687
      %v693 = vlaneseq
      %v694 = vshrl.u32 %v693, 7
      %v695 = vsub.s32 %v613, %v694
      %v696 = vrot.slane %v554, %v695
      %v697 = vsel %vm618, %v696, %v692
      %v698 = vlaneseq
      %v699 = vshrl.u32 %v698, 7
      %v700 = vsub.s32 %v620, %v699
      %v701 = vrot.slane %v555, %v700
      %v702 = vsel %vm625, %v701, %v697
      %v703 = vlaneseq
      %v704 = vshrl.u32 %v703, 7
      %v705 = vsub.s32 %v601, %v704
      %v706 = vrot.slane %v556, %v705
      %v707 = vlaneseq
      %v708 = vshrl.u32 %v707, 7
      %v709 = vsub.s32 %v606, %v708
      %v710 = vrot.slane %v557, %v709
      %v711 = vsel %vm611, %v710, %v706
      %v712 = vlaneseq
      %v713 = vshrl.u32 %v712, 7
      %v714 = vsub.s32 %v613, %v713
      %v715 = vrot.slane %v558, %v714
      %v716 = vsel %vm618, %v715, %v711
      %v717 = vlaneseq
      %v718 = vshrl.u32 %v717, 7
      %v719 = vsub.s32 %v620, %v718
      %v720 = vrot.slane %v559, %v719
      %v721 = vsel %vm625, %v720, %v716
      %v722 = vlaneseq
      %v723 = vshrl.u32 %v722, 7
      %v724 = vsub.s32 %v601, %v723
      %v725 = vrot.slane %v560, %v724
      %v726 = vlaneseq
      %v727 = vshrl.u32 %v726, 7
      %v728 = vsub.s32 %v606, %v727
      %v729 = vrot.slane %v561, %v728
      %v730 = vsel %vm611, %v729, %v725
      %v731 = vlaneseq
      %v732 = vshrl.u32 %v731, 7
      %v733 = vsub.s32 %v613, %v732
      %v734 = vrot.slane %v562, %v733
      %v735 = vsel %vm618, %v734, %v730
      %v736 = vlaneseq
      %v737 = vshrl.u32 %v736, 7
      %v738 = vsub.s32 %v620, %v737
      %v739 = vrot.slane %v563, %v738
      %v740 = vsel %vm625, %v739, %v735
      %v741 = vlaneseq
      %v742 = vshrl.u32 %v741, 7
      %v743 = vsub.s32 %v601, %v742
      %v744 = vrot.slane %v564, %v743
      %v745 = vlaneseq
      %v746 = vshrl.u32 %v745, 7
      %v747 = vsub.s32 %v606, %v746
      %v748 = vrot.slane %v565, %v747
      %v749 = vsel %vm611, %v748, %v744
      %v750 = vlaneseq
      %v751 = vshrl.u32 %v750, 7
      %v752 = vsub.s32 %v613, %v751
      %v753 = vrot.slane %v566, %v752
      %v754 = vsel %vm618, %v753, %v749
      %v755 = vlaneseq
      %v756 = vshrl.u32 %v755, 7
      %v757 = vsub.s32 %v620, %v756
      %v758 = vrot.slane %v567, %v757
      %v759 = vsel %vm625, %v758, %v754
      %vm760 = vcmask 1041409
      %v761 = vsel %vm760, %v645, %v626
      %vm762 = vcmask 1042434
      %v763 = vsel %vm762, %v664, %v761
      %vm764 = vcmask 1043459
      %v765 = vsel %vm764, %v683, %v763
      %vm766 = vcmask 1044484
      %v767 = vsel %vm766, %v702, %v765
      %vm768 = vcmask 1045509
      %v769 = vsel %vm768, %v721, %v767
      %vm770 = vcmask 1046534
      %v771 = vsel %vm770, %v740, %v769
      %vm772 = vcmask 1047559
      %v773 = vsel %vm772, %v759, %v771
      %vm775 = vcmask 261120
      %v776 = vsel %vm775, %v773, 0.0
      %777 = vadd.xlane.f32.xlu0 %v776
      %v778 = vpop.xlane.xlu0 %777
      %v779 = vrcp.pop 32.0
      %v780 = vmul.f32 %v778, %v779
      %v782 = vlaneseq
      %v783 = vshrl.u32 %v782, 7
      %v784 = vsub.s32 0, %v783
      %v785 = vrot.slane %v780, %v784
      %v786 = vlaneseq
      %v787 = vshrl.u32 %v786, 7
      %v788 = vsub.s32 1, %v787
      %v789 = vrot.slane %v780, %v788
      %v790 = vlaneseq
      %v791 = vshrl.u32 %v790, 7
      %v792 = vsub.s32 2, %v791
      %v793 = vrot.slane %v780, %v792
      %v794 = vlaneseq
      %v795 = vshrl.u32 %v794, 7
      %v796 = vsub.s32 3, %v795
      %v797 = vrot.slane %v780, %v796
      %v798 = vlaneseq
      %v799 = vshrl.u32 %v798, 7
      %v800 = vsub.s32 4, %v799
      %v801 = vrot.slane %v780, %v800
      %v802 = vlaneseq
      %v803 = vshrl.u32 %v802, 7
      %v804 = vsub.s32 5, %v803
      %v805 = vrot.slane %v780, %v804
      %v806 = vlaneseq
      %v807 = vshrl.u32 %v806, 7
      %v808 = vsub.s32 6, %v807
      %v809 = vrot.slane %v780, %v808
      %v810 = vlaneseq
      %v811 = vshrl.u32 %v810, 7
      %v812 = vsub.s32 7, %v811
      %v813 = vrot.slane %v780, %v812
      %v822 = vsub.f32 %v536, %v785
      %v823 = vsub.f32 %v537, %v785
      %v824 = vsub.f32 %v538, %v785
      %v825 = vsub.f32 %v539, %v785
      %v826 = vsub.f32 %v540, %v789
      %v827 = vsub.f32 %v541, %v789
      %v828 = vsub.f32 %v542, %v789
      %v829 = vsub.f32 %v543, %v789
      %v830 = vsub.f32 %v544, %v793
      %v831 = vsub.f32 %v545, %v793
      %v832 = vsub.f32 %v546, %v793
      %v833 = vsub.f32 %v547, %v793
      %v834 = vsub.f32 %v548, %v797
      %v835 = vsub.f32 %v549, %v797
      %v836 = vsub.f32 %v550, %v797
      %v837 = vsub.f32 %v551, %v797
      %v838 = vsub.f32 %v552, %v801
      %v839 = vsub.f32 %v553, %v801
      %v840 = vsub.f32 %v554, %v801
      %v841 = vsub.f32 %v555, %v801
      %v842 = vsub.f32 %v556, %v805
      %v843 = vsub.f32 %v557, %v805
      %v844 = vsub.f32 %v558, %v805
      %v845 = vsub.f32 %v559, %v805
      %v846 = vsub.f32 %v560, %v809
      %v847 = vsub.f32 %v561, %v809
      %v848 = vsub.f32 %v562, %v809
      %v849 = vsub.f32 %v563, %v809
      %v850 = vsub.f32 %v564, %v813
      %v851 = vsub.f32 %v565, %v813
      %v852 = vsub.f32 %v566, %v813
      %v853 = vsub.f32 %v567, %v813
      %v854 = vmul.f32 %v822, %v822
      %v855 = vmul.f32 %v823, %v823
      %v856 = vmul.f32 %v824, %v824
      %v857 = vmul.f32 %v825, %v825
      %v858 = vmul.f32 %v826, %v826
      %v859 = vmul.f32 %v827, %v827
      %v860 = vmul.f32 %v828, %v828
      %v861 = vmul.f32 %v829, %v829
      %v862 = vmul.f32 %v830, %v830
      %v863 = vmul.f32 %v831, %v831
      %v864 = vmul.f32 %v832, %v832
      %v865 = vmul.f32 %v833, %v833
      %v866 = vmul.f32 %v834, %v834
      %v867 = vmul.f32 %v835, %v835
      %v868 = vmul.f32 %v836, %v836
      %v869 = vmul.f32 %v837, %v837
      %v870 = vmul.f32 %v838, %v838
      %v871 = vmul.f32 %v839, %v839
      %v872 = vmul.f32 %v840, %v840
      %v873 = vmul.f32 %v841, %v841
      %v874 = vmul.f32 %v842, %v842
      %v875 = vmul.f32 %v843, %v843
      %v876 = vmul.f32 %v844, %v844
      %v877 = vmul.f32 %v845, %v845
      %v878 = vmul.f32 %v846, %v846
      %v879 = vmul.f32 %v847, %v847
      %v880 = vmul.f32 %v848, %v848
      %v881 = vmul.f32 %v849, %v849
      %v882 = vmul.f32 %v850, %v850
      %v883 = vmul.f32 %v851, %v851
      %v884 = vmul.f32 %v852, %v852
      %v885 = vmul.f32 %v853, %v853
      %918 = vset.pattern.permute.xlu0 0
      %919 = vperm.xlu0 %918, %v854
      %v920 = vpop.permute.xlu0 %919
      %921 = vset.pattern.permute.xlu0 0
      %922 = vperm.xlu0 %921, %v855
      %v923 = vpop.permute.xlu0 %922
      %924 = vset.pattern.permute.xlu0 0
      %925 = vperm.xlu0 %924, %v856
      %v926 = vpop.permute.xlu0 %925
      %927 = vset.pattern.permute.xlu0 0
      %928 = vperm.xlu0 %927, %v857
      %v929 = vpop.permute.xlu0 %928
      %930 = vset.pattern.permute.xlu0 0
      %931 = vperm.xlu0 %930, %v858
      %v932 = vpop.permute.xlu0 %931
      %933 = vset.pattern.permute.xlu0 0
      %934 = vperm.xlu0 %933, %v859
      %v935 = vpop.permute.xlu0 %934
      %936 = vset.pattern.permute.xlu0 0
      %937 = vperm.xlu0 %936, %v860
      %v938 = vpop.permute.xlu0 %937
      %939 = vset.pattern.permute.xlu0 0
      %940 = vperm.xlu0 %939, %v861
      %v941 = vpop.permute.xlu0 %940
      %942 = vset.pattern.permute.xlu0 0
      %943 = vperm.xlu0 %942, %v862
      %v944 = vpop.permute.xlu0 %943
      %945 = vset.pattern.permute.xlu0 0
      %946 = vperm.xlu0 %945, %v863
      %v947 = vpop.permute.xlu0 %946
      %948 = vset.pattern.permute.xlu0 0
      %949 = vperm.xlu0 %948, %v864
      %v950 = vpop.permute.xlu0 %949
      %951 = vset.pattern.permute.xlu0 0
      %952 = vperm.xlu0 %951, %v865
      %v953 = vpop.permute.xlu0 %952
      %954 = vset.pattern.permute.xlu0 0
      %955 = vperm.xlu0 %954, %v866
      %v956 = vpop.permute.xlu0 %955
      %957 = vset.pattern.permute.xlu0 0
      %958 = vperm.xlu0 %957, %v867
      %v959 = vpop.permute.xlu0 %958
      %960 = vset.pattern.permute.xlu0 0
      %961 = vperm.xlu0 %960, %v868
      %v962 = vpop.permute.xlu0 %961
      %963 = vset.pattern.permute.xlu0 0
      %964 = vperm.xlu0 %963, %v869
      %v965 = vpop.permute.xlu0 %964
      %966 = vset.pattern.permute.xlu0 0
      %967 = vperm.xlu0 %966, %v870
      %v968 = vpop.permute.xlu0 %967
      %969 = vset.pattern.permute.xlu0 0
      %970 = vperm.xlu0 %969, %v871
      %v971 = vpop.permute.xlu0 %970
      %972 = vset.pattern.permute.xlu0 0
      %973 = vperm.xlu0 %972, %v872
      %v974 = vpop.permute.xlu0 %973
      %975 = vset.pattern.permute.xlu0 0
      %976 = vperm.xlu0 %975, %v873
      %v977 = vpop.permute.xlu0 %976
      %978 = vset.pattern.permute.xlu0 0
      %979 = vperm.xlu0 %978, %v874
      %v980 = vpop.permute.xlu0 %979
      %981 = vset.pattern.permute.xlu0 0
      %982 = vperm.xlu0 %981, %v875
      %v983 = vpop.permute.xlu0 %982
      %984 = vset.pattern.permute.xlu0 0
      %985 = vperm.xlu0 %984, %v876
      %v986 = vpop.permute.xlu0 %985
      %987 = vset.pattern.permute.xlu0 0
      %988 = vperm.xlu0 %987, %v877
      %v989 = vpop.permute.xlu0 %988
      %990 = vset.pattern.permute.xlu0 0
      %991 = vperm.xlu0 %990, %v878
      %v992 = vpop.permute.xlu0 %991
      %993 = vset.pattern.permute.xlu0 0
      %994 = vperm.xlu0 %993, %v879
      %v995 = vpop.permute.xlu0 %994
      %996 = vset.pattern.permute.xlu0 0
      %997 = vperm.xlu0 %996, %v880
      %v998 = vpop.permute.xlu0 %997
      %999 = vset.pattern.permute.xlu0 0
      %1000 = vperm.xlu0 %999, %v881
      %v1001 = vpop.permute.xlu0 %1000
      %1002 = vset.pattern.permute.xlu0 0
      %1003 = vperm.xlu0 %1002, %v882
      %v1004 = vpop.permute.xlu0 %1003
      %1005 = vset.pattern.permute.xlu0 0
      %1006 = vperm.xlu0 %1005, %v883
      %v1007 = vpop.permute.xlu0 %1006
      %1008 = vset.pattern.permute.xlu0 0
      %1009 = vperm.xlu0 %1008, %v884
      %v1010 = vpop.permute.xlu0 %1009
      %1011 = vset.pattern.permute.xlu0 0
      %1012 = vperm.xlu0 %1011, %v885
      %v1013 = vpop.permute.xlu0 %1012
      %v1014 = vlaneseq
      %v1015 = vshrl.u32 %v1014, 7
      %v1016 = vsub.s32 %v601, %v1015
      %v1017 = vrot.slane %v920, %v1016
      %v1018 = vlaneseq
      %v1019 = vshrl.u32 %v1018, 7
      %v1020 = vsub.s32 %v606, %v1019
      %v1021 = vrot.slane %v923, %v1020
      %v1022 = vsel %vm611, %v1021, %v1017
      %v1023 = vlaneseq
      %v1024 = vshrl.u32 %v1023, 7
      %v1025 = vsub.s32 %v613, %v1024
      %v1026 = vrot.slane %v926, %v1025
      %v1027 = vsel %vm618, %v1026, %v1022
      %v1028 = vlaneseq
      %v1029 = vshrl.u32 %v1028, 7
      %v1030 = vsub.s32 %v620, %v1029
      %v1031 = vrot.slane %v929, %v1030
      %v1032 = vsel %vm625, %v1031, %v1027
      %v1033 = vlaneseq
      %v1034 = vshrl.u32 %v1033, 7
      %v1035 = vsub.s32 %v601, %v1034
      %v1036 = vrot.slane %v932, %v1035
      %v1037 = vlaneseq
      %v1038 = vshrl.u32 %v1037, 7
      %v1039 = vsub.s32 %v606, %v1038
      %v1040 = vrot.slane %v935, %v1039
      %v1041 = vsel %vm611, %v1040, %v1036
      %v1042 = vlaneseq
      %v1043 = vshrl.u32 %v1042, 7
      %v1044 = vsub.s32 %v613, %v1043
      %v1045 = vrot.slane %v938, %v1044
      %v1046 = vsel %vm618, %v1045, %v1041
      %v1047 = vlaneseq
      %v1048 = vshrl.u32 %v1047, 7
      %v1049 = vsub.s32 %v620, %v1048
      %v1050 = vrot.slane %v941, %v1049
      %v1051 = vsel %vm625, %v1050, %v1046
      %v1052 = vlaneseq
      %v1053 = vshrl.u32 %v1052, 7
      %v1054 = vsub.s32 %v601, %v1053
      %v1055 = vrot.slane %v944, %v1054
      %v1056 = vlaneseq
      %v1057 = vshrl.u32 %v1056, 7
      %v1058 = vsub.s32 %v606, %v1057
      %v1059 = vrot.slane %v947, %v1058
      %v1060 = vsel %vm611, %v1059, %v1055
      %v1061 = vlaneseq
      %v1062 = vshrl.u32 %v1061, 7
      %v1063 = vsub.s32 %v613, %v1062
      %v1064 = vrot.slane %v950, %v1063
      %v1065 = vsel %vm618, %v1064, %v1060
      %v1066 = vlaneseq
      %v1067 = vshrl.u32 %v1066, 7
      %v1068 = vsub.s32 %v620, %v1067
      %v1069 = vrot.slane %v953, %v1068
      %v1070 = vsel %vm625, %v1069, %v1065
      %v1071 = vlaneseq
      %v1072 = vshrl.u32 %v1071, 7
      %v1073 = vsub.s32 %v601, %v1072
      %v1074 = vrot.slane %v956, %v1073
      %v1075 = vlaneseq
      %v1076 = vshrl.u32 %v1075, 7
      %v1077 = vsub.s32 %v606, %v1076
      %v1078 = vrot.slane %v959, %v1077
      %v1079 = vsel %vm611, %v1078, %v1074
      %v1080 = vlaneseq
      %v1081 = vshrl.u32 %v1080, 7
      %v1082 = vsub.s32 %v613, %v1081
      %v1083 = vrot.slane %v962, %v1082
      %v1084 = vsel %vm618, %v1083, %v1079
      %v1085 = vlaneseq
      %v1086 = vshrl.u32 %v1085, 7
      %v1087 = vsub.s32 %v620, %v1086
      %v1088 = vrot.slane %v965, %v1087
      %v1089 = vsel %vm625, %v1088, %v1084
      %v1090 = vlaneseq
      %v1091 = vshrl.u32 %v1090, 7
      %v1092 = vsub.s32 %v601, %v1091
      %v1093 = vrot.slane %v968, %v1092
      %v1094 = vlaneseq
      %v1095 = vshrl.u32 %v1094, 7
      %v1096 = vsub.s32 %v606, %v1095
      %v1097 = vrot.slane %v971, %v1096
      %v1098 = vsel %vm611, %v1097, %v1093
      %v1099 = vlaneseq
      %v1100 = vshrl.u32 %v1099, 7
      %v1101 = vsub.s32 %v613, %v1100
      %v1102 = vrot.slane %v974, %v1101
      %v1103 = vsel %vm618, %v1102, %v1098
      %v1104 = vlaneseq
      %v1105 = vshrl.u32 %v1104, 7
      %v1106 = vsub.s32 %v620, %v1105
      %v1107 = vrot.slane %v977, %v1106
      %v1108 = vsel %vm625, %v1107, %v1103
      %v1109 = vlaneseq
      %v1110 = vshrl.u32 %v1109, 7
      %v1111 = vsub.s32 %v601, %v1110
      %v1112 = vrot.slane %v980, %v1111
      %v1113 = vlaneseq
      %v1114 = vshrl.u32 %v1113, 7
      %v1115 = vsub.s32 %v606, %v1114
      %v1116 = vrot.slane %v983, %v1115
      %v1117 = vsel %vm611, %v1116, %v1112
      %v1118 = vlaneseq
      %v1119 = vshrl.u32 %v1118, 7
      %v1120 = vsub.s32 %v613, %v1119
      %v1121 = vrot.slane %v986, %v1120
      %v1122 = vsel %vm618, %v1121, %v1117
      %v1123 = vlaneseq
      %v1124 = vshrl.u32 %v1123, 7
      %v1125 = vsub.s32 %v620, %v1124
      %v1126 = vrot.slane %v989, %v1125
      %v1127 = vsel %vm625, %v1126, %v1122
      %v1128 = vlaneseq
      %v1129 = vshrl.u32 %v1128, 7
      %v1130 = vsub.s32 %v601, %v1129
      %v1131 = vrot.slane %v992, %v1130
      %v1132 = vlaneseq
      %v1133 = vshrl.u32 %v1132, 7
      %v1134 = vsub.s32 %v606, %v1133
      %v1135 = vrot.slane %v995, %v1134
      %v1136 = vsel %vm611, %v1135, %v1131
      %v1137 = vlaneseq
      %v1138 = vshrl.u32 %v1137, 7
      %v1139 = vsub.s32 %v613, %v1138
      %v1140 = vrot.slane %v998, %v1139
      %v1141 = vsel %vm618, %v1140, %v1136
      %v1142 = vlaneseq
      %v1143 = vshrl.u32 %v1142, 7
      %v1144 = vsub.s32 %v620, %v1143
      %v1145 = vrot.slane %v1001, %v1144
      %v1146 = vsel %vm625, %v1145, %v1141
      %v1147 = vlaneseq
      %v1148 = vshrl.u32 %v1147, 7
      %v1149 = vsub.s32 %v601, %v1148
      %v1150 = vrot.slane %v1004, %v1149
      %v1151 = vlaneseq
      %v1152 = vshrl.u32 %v1151, 7
      %v1153 = vsub.s32 %v606, %v1152
      %v1154 = vrot.slane %v1007, %v1153
      %v1155 = vsel %vm611, %v1154, %v1150
      %v1156 = vlaneseq
      %v1157 = vshrl.u32 %v1156, 7
      %v1158 = vsub.s32 %v613, %v1157
      %v1159 = vrot.slane %v1010, %v1158
      %v1160 = vsel %vm618, %v1159, %v1155
      %v1161 = vlaneseq
      %v1162 = vshrl.u32 %v1161, 7
      %v1163 = vsub.s32 %v620, %v1162
      %v1164 = vrot.slane %v1013, %v1163
      %v1165 = vsel %vm625, %v1164, %v1160
      %v1166 = vsel %vm760, %v1051, %v1032
      %v1167 = vsel %vm762, %v1070, %v1166
      %v1168 = vsel %vm764, %v1089, %v1167
      %v1169 = vsel %vm766, %v1108, %v1168
      %v1170 = vsel %vm768, %v1127, %v1169
      %v1171 = vsel %vm770, %v1146, %v1170
      %v1172 = vsel %vm772, %v1165, %v1171
      %v1174 = vsel %vm775, %v1172, 0.0
      %1175 = vadd.xlane.f32.xlu0 %v1174
      %v1176 = vpop.xlane.xlu0 %1175
      %v1177 = vmul.f32 %v1176, %v779
      %v1178 = vadd.f32 %v1177, 1e-06
      %v1179 = vrsqrt.pop %v1178
      %v1181 = vlaneseq
      %v1182 = vshrl.u32 %v1181, 7
      %v1183 = vsub.s32 0, %v1182
      %v1184 = vrot.slane %v1179, %v1183
      %v1185 = vlaneseq
      %v1186 = vshrl.u32 %v1185, 7
      %v1187 = vsub.s32 1, %v1186
      %v1188 = vrot.slane %v1179, %v1187
      %v1189 = vlaneseq
      %v1190 = vshrl.u32 %v1189, 7
      %v1191 = vsub.s32 2, %v1190
      %v1192 = vrot.slane %v1179, %v1191
      %v1193 = vlaneseq
      %v1194 = vshrl.u32 %v1193, 7
      %v1195 = vsub.s32 3, %v1194
      %v1196 = vrot.slane %v1179, %v1195
      %v1197 = vlaneseq
      %v1198 = vshrl.u32 %v1197, 7
      %v1199 = vsub.s32 4, %v1198
      %v1200 = vrot.slane %v1179, %v1199
      %v1201 = vlaneseq
      %v1202 = vshrl.u32 %v1201, 7
      %v1203 = vsub.s32 5, %v1202
      %v1204 = vrot.slane %v1179, %v1203
      %v1205 = vlaneseq
      %v1206 = vshrl.u32 %v1205, 7
      %v1207 = vsub.s32 6, %v1206
      %v1208 = vrot.slane %v1179, %v1207
      %v1209 = vlaneseq
      %v1210 = vshrl.u32 %v1209, 7
      %v1211 = vsub.s32 7, %v1210
      %v1212 = vrot.slane %v1179, %v1211
      %v1221 = vmul.f32 %v822, %v1184
      %v1222 = vmul.f32 %v823, %v1184
      %v1223 = vmul.f32 %v824, %v1184
      %v1224 = vmul.f32 %v825, %v1184
      %v1225 = vmul.f32 %v826, %v1188
      %v1226 = vmul.f32 %v827, %v1188
      %v1227 = vmul.f32 %v828, %v1188
      %v1228 = vmul.f32 %v829, %v1188
      %v1229 = vmul.f32 %v830, %v1192
      %v1230 = vmul.f32 %v831, %v1192
      %v1231 = vmul.f32 %v832, %v1192
      %v1232 = vmul.f32 %v833, %v1192
      %v1233 = vmul.f32 %v834, %v1196
      %v1234 = vmul.f32 %v835, %v1196
      %v1235 = vmul.f32 %v836, %v1196
      %v1236 = vmul.f32 %v837, %v1196
      %v1237 = vmul.f32 %v838, %v1200
      %v1238 = vmul.f32 %v839, %v1200
      %v1239 = vmul.f32 %v840, %v1200
      %v1240 = vmul.f32 %v841, %v1200
      %v1241 = vmul.f32 %v842, %v1204
      %v1242 = vmul.f32 %v843, %v1204
      %v1243 = vmul.f32 %v844, %v1204
      %v1244 = vmul.f32 %v845, %v1204
      %v1245 = vmul.f32 %v846, %v1208
      %v1246 = vmul.f32 %v847, %v1208
      %v1247 = vmul.f32 %v848, %v1208
      %v1248 = vmul.f32 %v849, %v1208
      %v1249 = vmul.f32 %v850, %v1212
      %v1250 = vmul.f32 %v851, %v1212
      %v1251 = vmul.f32 %v852, %v1212
      %v1252 = vmul.f32 %v853, %v1212
      %v1253 = vld [vmem:[%s1] sm:$0x1]
      %v1255 = vlaneseq
      %v1256 = vshrl.u32 %v1255, 7
      %v1257 = vsub.s32 0, %v1256
      %v1258 = vrot.slane %v1253, %v1257
      %1260 = vbcast.lane.b32.xlu0 %v1258, 256
      %v1261 = vpop.permute.xlu0 %1260
      %s1263 = sor.u32 256, 8
      %1264 = vbcast.lane.b32.xlu0 %v1258, %s1263
      %v1265 = vpop.permute.xlu0 %1264
      %s1267 = sor.u32 256, 16
      %1268 = vbcast.lane.b32.xlu0 %v1258, %s1267
      %v1269 = vpop.permute.xlu0 %1268
      %s1271 = sor.u32 256, 24
      %1272 = vbcast.lane.b32.xlu0 %v1258, %s1271
      %v1273 = vpop.permute.xlu0 %1272
      %v1278 = vmul.f32 %v1221, %v1261
      %v1279 = vmul.f32 %v1222, %v1265
      %v1280 = vmul.f32 %v1223, %v1269
      %v1281 = vmul.f32 %v1224, %v1273
      %v1282 = vmul.f32 %v1225, %v1261
      %v1283 = vmul.f32 %v1226, %v1265
      %v1284 = vmul.f32 %v1227, %v1269
      %v1285 = vmul.f32 %v1228, %v1273
      %v1286 = vmul.f32 %v1229, %v1261
      %v1287 = vmul.f32 %v1230, %v1265
      %v1288 = vmul.f32 %v1231, %v1269
      %v1289 = vmul.f32 %v1232, %v1273
      %v1290 = vmul.f32 %v1233, %v1261
      %v1291 = vmul.f32 %v1234, %v1265
      %v1292 = vmul.f32 %v1235, %v1269
      %v1293 = vmul.f32 %v1236, %v1273
      %v1294 = vmul.f32 %v1237, %v1261
      %v1295 = vmul.f32 %v1238, %v1265
      %v1296 = vmul.f32 %v1239, %v1269
      %v1297 = vmul.f32 %v1240, %v1273
      %v1298 = vmul.f32 %v1241, %v1261
      %v1299 = vmul.f32 %v1242, %v1265
      %v1300 = vmul.f32 %v1243, %v1269
      %v1301 = vmul.f32 %v1244, %v1273
      %v1302 = vmul.f32 %v1245, %v1261
      %v1303 = vmul.f32 %v1246, %v1265
      %v1304 = vmul.f32 %v1247, %v1269
      %v1305 = vmul.f32 %v1248, %v1273
      %v1306 = vmul.f32 %v1249, %v1261
      %v1307 = vmul.f32 %v1250, %v1265
      %v1308 = vmul.f32 %v1251, %v1269
      %v1309 = vmul.f32 %v1252, %v1273
      %v1310 = vld [vmem:[%s2] sm:$0x1]
      %v1312 = vlaneseq
      %v1313 = vshrl.u32 %v1312, 7
      %v1314 = vsub.s32 0, %v1313
      %v1315 = vrot.slane %v1310, %v1314
      %1317 = vbcast.lane.b32.xlu0 %v1315, 256
      %v1318 = vpop.permute.xlu0 %1317
      %s1320 = sor.u32 256, 8
      %1321 = vbcast.lane.b32.xlu0 %v1315, %s1320
      %v1322 = vpop.permute.xlu0 %1321
      %s1324 = sor.u32 256, 16
      %1325 = vbcast.lane.b32.xlu0 %v1315, %s1324
      %v1326 = vpop.permute.xlu0 %1325
      %s1328 = sor.u32 256, 24
      %1329 = vbcast.lane.b32.xlu0 %v1315, %s1328
      %v1330 = vpop.permute.xlu0 %1329
      %v1335 = vadd.f32 %v1278, %v1318
      %v1336 = vadd.f32 %v1279, %v1322
      %v1337 = vadd.f32 %v1280, %v1326
      %v1338 = vadd.f32 %v1281, %v1330
      %v1339 = vadd.f32 %v1282, %v1318
      %v1340 = vadd.f32 %v1283, %v1322
      %v1341 = vadd.f32 %v1284, %v1326
      %v1342 = vadd.f32 %v1285, %v1330
      %v1343 = vadd.f32 %v1286, %v1318
      %v1344 = vadd.f32 %v1287, %v1322
      %v1345 = vadd.f32 %v1288, %v1326
      %v1346 = vadd.f32 %v1289, %v1330
      %v1347 = vadd.f32 %v1290, %v1318
      %v1348 = vadd.f32 %v1291, %v1322
      %v1349 = vadd.f32 %v1292, %v1326
      %v1350 = vadd.f32 %v1293, %v1330
      %v1351 = vadd.f32 %v1294, %v1318
      %v1352 = vadd.f32 %v1295, %v1322
      %v1353 = vadd.f32 %v1296, %v1326
      %v1354 = vadd.f32 %v1297, %v1330
      %v1355 = vadd.f32 %v1298, %v1318
      %v1356 = vadd.f32 %v1299, %v1322
      %v1357 = vadd.f32 %v1300, %v1326
      %v1358 = vadd.f32 %v1301, %v1330
      %v1359 = vadd.f32 %v1302, %v1318
      %v1360 = vadd.f32 %v1303, %v1322
      %v1361 = vadd.f32 %v1304, %v1326
      %v1362 = vadd.f32 %v1305, %v1330
      %v1363 = vadd.f32 %v1306, %v1318
      %v1364 = vadd.f32 %v1307, %v1322
      %v1365 = vadd.f32 %v1308, %v1326
      %v1366 = vadd.f32 %v1309, %v1330
      %v1367 = vld [vmem:[#allocation6] sm:$0xff]
      %v1368 = vld [vmem:[#allocation6 + $0x8] sm:$0xff]
      %v1369 = vld [vmem:[#allocation6 + $0x10] sm:$0xff]
      %v1370 = vld [vmem:[#allocation6 + $0x18] sm:$0xff]
      %v1371 = vld [vmem:[%s4] sm:$0x1]
      %v1373 = vlaneseq
      %v1374 = vshrl.u32 %v1373, 7
      %v1375 = vsub.s32 0, %v1374
      %v1376 = vrot.slane %v1371, %v1375
      %1410 = vset.pattern.permute.xlu0 0
      %1411 = vperm.xlu0 %1410, %v1335
      %v1412 = vpop.permute.xlu0 %1411
      %1413 = vset.pattern.permute.xlu0 0
      %1414 = vperm.xlu0 %1413, %v1336
      %v1415 = vpop.permute.xlu0 %1414
      %1416 = vset.pattern.permute.xlu0 0
      %1417 = vperm.xlu0 %1416, %v1337
      %v1418 = vpop.permute.xlu0 %1417
      %1419 = vset.pattern.permute.xlu0 0
      %1420 = vperm.xlu0 %1419, %v1338
      %v1421 = vpop.permute.xlu0 %1420
      %1422 = vset.pattern.permute.xlu0 0
      %1423 = vperm.xlu0 %1422, %v1339
      %v1424 = vpop.permute.xlu0 %1423
      %1425 = vset.pattern.permute.xlu0 0
      %1426 = vperm.xlu0 %1425, %v1340
      %v1427 = vpop.permute.xlu0 %1426
      %1428 = vset.pattern.permute.xlu0 0
      %1429 = vperm.xlu0 %1428, %v1341
      %v1430 = vpop.permute.xlu0 %1429
      %1431 = vset.pattern.permute.xlu0 0
      %1432 = vperm.xlu0 %1431, %v1342
      %v1433 = vpop.permute.xlu0 %1432
      %1434 = vset.pattern.permute.xlu0 0
      %1435 = vperm.xlu0 %1434, %v1343
      %v1436 = vpop.permute.xlu0 %1435
      %1437 = vset.pattern.permute.xlu0 0
      %1438 = vperm.xlu0 %1437, %v1344
      %v1439 = vpop.permute.xlu0 %1438
      %1440 = vset.pattern.permute.xlu0 0
      %1441 = vperm.xlu0 %1440, %v1345
      %v1442 = vpop.permute.xlu0 %1441
      %1443 = vset.pattern.permute.xlu0 0
      %1444 = vperm.xlu0 %1443, %v1346
      %v1445 = vpop.permute.xlu0 %1444
      %1446 = vset.pattern.permute.xlu0 0
      %1447 = vperm.xlu0 %1446, %v1347
      %v1448 = vpop.permute.xlu0 %1447
      %1449 = vset.pattern.permute.xlu0 0
      %1450 = vperm.xlu0 %1449, %v1348
      %v1451 = vpop.permute.xlu0 %1450
      %1452 = vset.pattern.permute.xlu0 0
      %1453 = vperm.xlu0 %1452, %v1349
      %v1454 = vpop.permute.xlu0 %1453
      %1455 = vset.pattern.permute.xlu0 0
      %1456 = vperm.xlu0 %1455, %v1350
      %v1457 = vpop.permute.xlu0 %1456
      %1458 = vset.pattern.permute.xlu0 0
      %1459 = vperm.xlu0 %1458, %v1351
      %v1460 = vpop.permute.xlu0 %1459
      %1461 = vset.pattern.permute.xlu0 0
      %1462 = vperm.xlu0 %1461, %v1352
      %v1463 = vpop.permute.xlu0 %1462
      %1464 = vset.pattern.permute.xlu0 0
      %1465 = vperm.xlu0 %1464, %v1353
      %v1466 = vpop.permute.xlu0 %1465
      %1467 = vset.pattern.permute.xlu0 0
      %1468 = vperm.xlu0 %1467, %v1354
      %v1469 = vpop.permute.xlu0 %1468
      %1470 = vset.pattern.permute.xlu0 0
      %1471 = vperm.xlu0 %1470, %v1355
      %v1472 = vpop.permute.xlu0 %1471
      %1473 = vset.pattern.permute.xlu0 0
      %1474 = vperm.xlu0 %1473, %v1356
      %v1475 = vpop.permute.xlu0 %1474
      %1476 = vset.pattern.permute.xlu0 0
      %1477 = vperm.xlu0 %1476, %v1357
      %v1478 = vpop.permute.xlu0 %1477
      %1479 = vset.pattern.permute.xlu0 0
      %1480 = vperm.xlu0 %1479, %v1358
      %v1481 = vpop.permute.xlu0 %1480
      %1482 = vset.pattern.permute.xlu0 0
      %1483 = vperm.xlu0 %1482, %v1359
      %v1484 = vpop.permute.xlu0 %1483
      %1485 = vset.pattern.permute.xlu0 0
      %1486 = vperm.xlu0 %1485, %v1360
      %v1487 = vpop.permute.xlu0 %1486
      %1488 = vset.pattern.permute.xlu0 0
      %1489 = vperm.xlu0 %1488, %v1361
      %v1490 = vpop.permute.xlu0 %1489
      %1491 = vset.pattern.permute.xlu0 0
      %1492 = vperm.xlu0 %1491, %v1362
      %v1493 = vpop.permute.xlu0 %1492
      %1494 = vset.pattern.permute.xlu0 0
      %1495 = vperm.xlu0 %1494, %v1363
      %v1496 = vpop.permute.xlu0 %1495
      %1497 = vset.pattern.permute.xlu0 0
      %1498 = vperm.xlu0 %1497, %v1364
      %v1499 = vpop.permute.xlu0 %1498
      %1500 = vset.pattern.permute.xlu0 0
      %1501 = vperm.xlu0 %1500, %v1365
      %v1502 = vpop.permute.xlu0 %1501
      %1503 = vset.pattern.permute.xlu0 0
      %1504 = vperm.xlu0 %1503, %v1366
      %v1505 = vpop.permute.xlu0 %1504
      %v1506 = vlaneseq
      %v1507 = vshrl.u32 %v1506, 7
      %v1508 = vsub.s32 %v601, %v1507
      %v1509 = vrot.slane %v1412, %v1508
      %v1510 = vlaneseq
      %v1511 = vshrl.u32 %v1510, 7
      %v1512 = vsub.s32 %v606, %v1511
      %v1513 = vrot.slane %v1415, %v1512
      %v1514 = vsel %vm611, %v1513, %v1509
      %v1515 = vlaneseq
      %v1516 = vshrl.u32 %v1515, 7
      %v1517 = vsub.s32 %v613, %v1516
      %v1518 = vrot.slane %v1418, %v1517
      %v1519 = vsel %vm618, %v1518, %v1514
      %v1520 = vlaneseq
      %v1521 = vshrl.u32 %v1520, 7
      %v1522 = vsub.s32 %v620, %v1521
      %v1523 = vrot.slane %v1421, %v1522
      %v1524 = vsel %vm625, %v1523, %v1519
      %v1525 = vlaneseq
      %v1526 = vshrl.u32 %v1525, 7
      %v1527 = vsub.s32 %v601, %v1526
      %v1528 = vrot.slane %v1424, %v1527
      %v1529 = vlaneseq
      %v1530 = vshrl.u32 %v1529, 7
      %v1531 = vsub.s32 %v606, %v1530
      %v1532 = vrot.slane %v1427, %v1531
      %v1533 = vsel %vm611, %v1532, %v1528
      %v1534 = vlaneseq
      %v1535 = vshrl.u32 %v1534, 7
      %v1536 = vsub.s32 %v613, %v1535
      %v1537 = vrot.slane %v1430, %v1536
      %v1538 = vsel %vm618, %v1537, %v1533
      %v1539 = vlaneseq
      %v1540 = vshrl.u32 %v1539, 7
      %v1541 = vsub.s32 %v620, %v1540
      %v1542 = vrot.slane %v1433, %v1541
      %v1543 = vsel %vm625, %v1542, %v1538
      %v1544 = vlaneseq
      %v1545 = vshrl.u32 %v1544, 7
      %v1546 = vsub.s32 %v601, %v1545
      %v1547 = vrot.slane %v1436, %v1546
      %v1548 = vlaneseq
      %v1549 = vshrl.u32 %v1548, 7
      %v1550 = vsub.s32 %v606, %v1549
      %v1551 = vrot.slane %v1439, %v1550
      %v1552 = vsel %vm611, %v1551, %v1547
      %v1553 = vlaneseq
      %v1554 = vshrl.u32 %v1553, 7
      %v1555 = vsub.s32 %v613, %v1554
      %v1556 = vrot.slane %v1442, %v1555
      %v1557 = vsel %vm618, %v1556, %v1552
      %v1558 = vlaneseq
      %v1559 = vshrl.u32 %v1558, 7
      %v1560 = vsub.s32 %v620, %v1559
      %v1561 = vrot.slane %v1445, %v1560
      %v1562 = vsel %vm625, %v1561, %v1557
      %v1563 = vlaneseq
      %v1564 = vshrl.u32 %v1563, 7
      %v1565 = vsub.s32 %v601, %v1564
      %v1566 = vrot.slane %v1448, %v1565
      %v1567 = vlaneseq
      %v1568 = vshrl.u32 %v1567, 7
      %v1569 = vsub.s32 %v606, %v1568
      %v1570 = vrot.slane %v1451, %v1569
      %v1571 = vsel %vm611, %v1570, %v1566
      %v1572 = vlaneseq
      %v1573 = vshrl.u32 %v1572, 7
      %v1574 = vsub.s32 %v613, %v1573
      %v1575 = vrot.slane %v1454, %v1574
      %v1576 = vsel %vm618, %v1575, %v1571
      %v1577 = vlaneseq
      %v1578 = vshrl.u32 %v1577, 7
      %v1579 = vsub.s32 %v620, %v1578
      %v1580 = vrot.slane %v1457, %v1579
      %v1581 = vsel %vm625, %v1580, %v1576
      %v1582 = vlaneseq
      %v1583 = vshrl.u32 %v1582, 7
      %v1584 = vsub.s32 %v601, %v1583
      %v1585 = vrot.slane %v1460, %v1584
      %v1586 = vlaneseq
      %v1587 = vshrl.u32 %v1586, 7
      %v1588 = vsub.s32 %v606, %v1587
      %v1589 = vrot.slane %v1463, %v1588
      %v1590 = vsel %vm611, %v1589, %v1585
      %v1591 = vlaneseq
      %v1592 = vshrl.u32 %v1591, 7
      %v1593 = vsub.s32 %v613, %v1592
      %v1594 = vrot.slane %v1466, %v1593
      %v1595 = vsel %vm618, %v1594, %v1590
      %v1596 = vlaneseq
      %v1597 = vshrl.u32 %v1596, 7
      %v1598 = vsub.s32 %v620, %v1597
      %v1599 = vrot.slane %v1469, %v1598
      %v1600 = vsel %vm625, %v1599, %v1595
      %v1601 = vlaneseq
      %v1602 = vshrl.u32 %v1601, 7
      %v1603 = vsub.s32 %v601, %v1602
      %v1604 = vrot.slane %v1472, %v1603
      %v1605 = vlaneseq
      %v1606 = vshrl.u32 %v1605, 7
      %v1607 = vsub.s32 %v606, %v1606
      %v1608 = vrot.slane %v1475, %v1607
      %v1609 = vsel %vm611, %v1608, %v1604
      %v1610 = vlaneseq
      %v1611 = vshrl.u32 %v1610, 7
      %v1612 = vsub.s32 %v613, %v1611
      %v1613 = vrot.slane %v1478, %v1612
      %v1614 = vsel %vm618, %v1613, %v1609
      %v1615 = vlaneseq
      %v1616 = vshrl.u32 %v1615, 7
      %v1617 = vsub.s32 %v620, %v1616
      %v1618 = vrot.slane %v1481, %v1617
      %v1619 = vsel %vm625, %v1618, %v1614
      %v1620 = vlaneseq
      %v1621 = vshrl.u32 %v1620, 7
      %v1622 = vsub.s32 %v601, %v1621
      %v1623 = vrot.slane %v1484, %v1622
      %v1624 = vlaneseq
      %v1625 = vshrl.u32 %v1624, 7
      %v1626 = vsub.s32 %v606, %v1625
      %v1627 = vrot.slane %v1487, %v1626
      %v1628 = vsel %vm611, %v1627, %v1623
      %v1629 = vlaneseq
      %v1630 = vshrl.u32 %v1629, 7
      %v1631 = vsub.s32 %v613, %v1630
      %v1632 = vrot.slane %v1490, %v1631
      %v1633 = vsel %vm618, %v1632, %v1628
      %v1634 = vlaneseq
      %v1635 = vshrl.u32 %v1634, 7
      %v1636 = vsub.s32 %v620, %v1635
      %v1637 = vrot.slane %v1493, %v1636
      %v1638 = vsel %vm625, %v1637, %v1633
      %v1639 = vlaneseq
      %v1640 = vshrl.u32 %v1639, 7
      %v1641 = vsub.s32 %v601, %v1640
      %v1642 = vrot.slane %v1496, %v1641
      %v1643 = vlaneseq
      %v1644 = vshrl.u32 %v1643, 7
      %v1645 = vsub.s32 %v606, %v1644
      %v1646 = vrot.slane %v1499, %v1645
      %v1647 = vsel %vm611, %v1646, %v1642
      %v1648 = vlaneseq
      %v1649 = vshrl.u32 %v1648, 7
      %v1650 = vsub.s32 %v613, %v1649
      %v1651 = vrot.slane %v1502, %v1650
      %v1652 = vsel %vm618, %v1651, %v1647
      %v1653 = vlaneseq
      %v1654 = vshrl.u32 %v1653, 7
      %v1655 = vsub.s32 %v620, %v1654
      %v1656 = vrot.slane %v1505, %v1655
      %v1657 = vsel %vm625, %v1656, %v1652
      %v1658 = vsel %vm760, %v1543, %v1524
      %v1659 = vsel %vm762, %v1562, %v1658
      %v1660 = vsel %vm764, %v1581, %v1659
      %v1661 = vsel %vm766, %v1600, %v1660
      %v1662 = vsel %vm768, %v1619, %v1661
      %v1663 = vsel %vm770, %v1638, %v1662
      %v1664 = vsel %vm772, %v1657, %v1663
      %v1665 = vsel %vm775, %v1664, 0
      %1667 = vmatprep.subr.mxu0 0.0
      %1668 = vmatpush1.msra.mxu0 %v1367
      %1669 = vmatprep.subr.mxu0 0.0
      %1670 = vmatpush1.msra.mxu0 %v1368
      %1671 = vmatprep.subr.mxu0 0.0
      %1672 = vmatpush1.msra.mxu0 %v1369
      %1673 = vmatprep.subr.mxu0 0.0
      %1674 = vmatpush1.msra.mxu0 %v1370
      %1675 = vmatprep.subr.mxu0 0.0
      %1676 = vmatpush1.msra.mxu0 0.0
      %1677 = vmatprep.subr.mxu0 0.0
      %1678 = vmatpush1.msra.mxu0 0.0
      %1679 = vmatprep.subr.mxu0 0.0
      %1680 = vmatpush1.msra.mxu0 0.0
      %1681 = vmatprep.subr.mxu0 0.0
      %1682 = vmatpush1.msra.mxu0 0.0
      %1683 = vmatprep.subr.mxu0 0.0
      %1684 = vmatpush1.msra.mxu0 0.0
      %1685 = vmatprep.subr.mxu0 0.0
      %1686 = vmatpush1.msra.mxu0 0.0
      %1687 = vmatprep.subr.mxu0 0.0
      %1688 = vmatpush1.msra.mxu0 0.0
      %1689 = vmatprep.subr.mxu0 0.0
      %1690 = vmatpush1.msra.mxu0 0.0
      %1691 = vmatprep.subr.mxu0 0.0
      %1692 = vmatpush1.msra.mxu0 0.0
      %1693 = vmatprep.subr.mxu0 0.0
      %1694 = vmatpush1.msra.mxu0 0.0
      %1695 = vmatprep.subr.mxu0 0.0
      %1696 = vmatpush1.msra.mxu0 0.0
      %1697 = vmatprep.subr.mxu0 0.0
      %1698 = vmatpush1.msra.mxu0 0.0
      %1699 = vmatprep.subr.mxu0 0.0
      %1700 = vmatpush1.msra.mxu0 0.0
      %1701 = vmatprep.subr.mxu0 0.0
      %1702 = vmatpush1.msra.mxu0 0.0
      %1703 = vmatprep.subr.mxu0 0.0
      %1704 = vmatpush1.msra.mxu0 0.0
      %1705 = vmatprep.subr.mxu0 0.0
      %1706 = vmatpush1.msra.mxu0 0.0
      %1707 = vmatprep.subr.mxu0 0.0
      %1708 = vmatpush1.msra.mxu0 0.0
      %1709 = vmatprep.subr.mxu0 0.0
      %1710 = vmatpush1.msra.mxu0 0.0
      %1711 = vmatprep.subr.mxu0 0.0
      %1712 = vmatpush1.msra.mxu0 0.0
      %1713 = vmatprep.subr.mxu0 0.0
      %1714 = vmatpush1.msra.mxu0 0.0
      %1715 = vmatprep.subr.mxu0 0.0
      %1716 = vmatpush1.msra.mxu0 0.0
      %1717 = vmatprep.subr.mxu0 0.0
      %1718 = vmatpush1.msra.mxu0 0.0
      %1719 = vmatprep.subr.mxu0 0.0
      %1720 = vmatpush1.msra.mxu0 0.0
      %1721 = vmatprep.subr.mxu0 0.0
      %1722 = vmatpush1.msra.mxu0 0.0
      %1723 = vmatprep.subr.mxu0 0.0
      %1724 = vmatpush1.msra.mxu0 0.0
      %1725 = vmatprep.subr.mxu0 0.0
      %1726 = vmatpush1.msra.mxu0 0.0
      %1727 = vmatprep.subr.mxu0 0.0
      %1728 = vmatpush1.msra.mxu0 0.0
      %1729 = vmatprep.subr.mxu0 0.0
      %1730 = vmatpush1.msra.mxu0 0.0
      %1731 = vmatprep.mubr.f32.mxu0 0.0
      %1732 = vmatmul.mubr.f32.gmra.mrb[0].mxu0 %v1665
      %v1733 = vpop.f32.mrb[0].mxu0
      %v1734 = vadd.f32 %v1376, %v1733
      %v1735 = vpop.f32.mrb[0].mxu0
      %1736 = vdwg.mxu0
      %1737 = vst [vmem:[#allocation8] sm:$0xff] %v1734
    $region37: #{tpu_custom_call.1} parent=1 // pred_fallthru
      _
    // Predicated region
    $region38: #{tpu_custom_call.1} parent=1 // pred_check
      _
    $region39: #{tpu_custom_call.1} parent=1 // pred_check_branch
      %1739 = sbr.rel (0) target = $region41
    $region40: #{tpu_custom_call.1} parent=1 // pred_region
      %s1741 = ssub.s32 128, 128
      %1742 = vsyncadd [#allocation5], %s1741
      %s1744 = sshll.u32 [#allocation8], 4
      %s1745 = int_to_ptr.vmem [resolvable:$true] %s1744
      %1747 = dma.vmem_to_hbm [thread:$0]  %s1745, 128, %s5, [#allocation5]
    $region41: #{tpu_custom_call.1} parent=1 // pred_fallthru
      _
    // Predicated region
    $region42: #{tpu_custom_call.1} parent=1 // pred_check
      _
    $region43: #{tpu_custom_call.1} parent=1 // pred_check_branch
      %1749 = sbr.rel (0) target = $region45
    $region44: #{tpu_custom_call.1} parent=1 // pred_region
      %1750 = dma.done [#allocation5], 128
    $region45: #{tpu_custom_call.1} parent=1 // pred_fallthru
      _
    %1751 = vsyncpa [#allocation4], 1
    %1752 = vsyncpa [#allocation7], 1
    %1753 = vsyncpa [#allocation5], 1

</llo_original>
